<compile_context>
chip_gen: v7x
topology: tpu7x:2x2x1
jax: 0.10.0
libtpu: 0.0.40
codegen_flags: <defaults>
</compile_context>

<pallas_src>
import functools

import jax
import jax.numpy as jnp
from jax.experimental import pallas as pl
from jax.experimental.pallas import tpu as pltpu

_MIB = 1024 * 1024


def _round_up(x, m):
    return ((x + m - 1) // m) * m


def _cdiv(a, b):
    return -(-a // b)


# ----------------------------------------------------------------------------- hardware
def _tpu_hw():
    """Return (physical VMEM bytes, TensorCores usable by a 'parallel' grid axis)."""
    vmem_cap = 64 * _MIB            # conservative fallback (v7x-sized)
    n_cores = 1
    try:
        info = pltpu.get_tpu_info()
        cap = getattr(info, "vmem_capacity_bytes", None)
        if cap:
            vmem_cap = int(cap)
        for attr in ("num_cores", "tensorcore_count", "num_tensorcores", "core_count"):
            v = getattr(info, attr, None)
            if isinstance(v, int) and v > 0:
                n_cores = v
                break
    except Exception:
        pass
    try:
        kind = jax.local_devices()[0].device_kind.lower()
        if any(tag in kind for tag in ("v7", "v4", "v5p")):   # 2-TC / megacore parts
            n_cores = max(n_cores, 2)
    except Exception:
        pass
    if vmem_cap <= 64 * _MIB:       # 64 MiB per core is the v7x signature (2 TCs/chip)
        n_cores = max(n_cores, 2)
    return vmem_cap, n_cores


@functools.lru_cache(maxsize=None)
def _single_buffer_supported():
    """Probe (once) whether pipeline_mode=pl.Buffered(1) lowers on this backend."""
    if not hasattr(pl, "Buffered"):
        return False
    try:
        def _k(x_ref, o_ref):
            o_ref[...] = x_ref[...]

        spec = pl.BlockSpec((8, 128), lambda i: (0, 0), pipeline_mode=pl.Buffered(1))
        f = pl.pallas_call(
            _k,
            out_shape=jax.ShapeDtypeStruct((8, 128), jnp.float32),
            grid_spec=pltpu.PrefetchScalarGridSpec(
                num_scalar_prefetch=0, grid=(1,),
                in_specs=[spec],
                out_specs=pl.BlockSpec((8, 128), lambda i: (0, 0))),
        )
        jax.block_until_ready(f(jnp.zeros((8, 128), jnp.float32)))
        return True
    except Exception:
        return False


# ----------------------------------------------------------------------------- tiling
def _balanced_tm(M, tm_cap, n_cores, granule):
    """Largest row tile <= tm_cap with grid steps balanced across TensorCores."""
    if M <= tm_cap and (n_cores <= 1 or M <= 64):
        return M                                   # single full-extent row block
    unit = n_cores if n_cores > 1 else 1
    n = max(_cdiv(_cdiv(M, tm_cap), unit) * unit, unit)
    tm = min(_round_up(_cdiv(M, n), granule), (tm_cap // granule) * granule)
    return max(tm, granule)


def _choose_tm(M, Hp, act_bytes, wf, budget, n_cores, granule):
    """Row tile for the resident-weights kernel; None if the weights don't fit VMEM."""
    fixed = 16 * Hp * Hp * wf + 12 * Hp * wf + 4096          # 8 bf16 Hp^2 slabs + biases
    per_row = Hp * (2 * (3 * act_bytes + 4) + 56)            # dbuf in/out + f32/bf16 temps
    avail = budget - fixed
    if avail < per_row * granule:
        return None
    tm_cap = min((int(avail // per_row) // granule) * granule, 1024)
    if tm_cap < granule:
        return None
    return _balanced_tm(M, tm_cap, n_cores, granule)


def _choose_ktile(M, Hp, act_bytes, wf, budget, n_cores, granule, max_tk=None):
    """(tm, tk) for the K-tiled kernel; None if even tk=128 does not fit."""
    per_row = Hp * (2 * (3 * act_bytes + 4) + 8 + 56)        # + f32 acc1/acc2 scratch
    w3_fixed = 4 * Hp * Hp * wf + 12 * Hp * wf + 4096        # resident W3 slabs + biases
    cands = [tk for tk in (512, 384, 256, 128) if tk <= Hp and Hp % tk == 0]
    if max_tk is not None:
        cands = [tk for tk in cands if tk <= max_tk] or cands[-1:]
    for tk in cands:
        fixed = w3_fixed + 24 * tk * Hp                      # dbuf bf16 first-layer blocks
        avail = budget - fixed
        if avail < per_row * granule:
            continue
        tm_cap = min((int(avail // per_row) // granule) * granule, 1024)
        if tm_cap < granule:
            continue
        return _balanced_tm(M, tm_cap, n_cores, granule), tk
    return None


# ----------------------------------------------------------------------------- kernels
def fuse_layer_kernel(orig_ref, x1_ref, x2_ref,
                      w12o_ref, w1x_ref, w1p_ref, w2x_ref, w2p_ref,
                      w3a_ref, w3b_ref, b1_ref, b2_ref, b3_ref,
                      out_ref):
    """All weights resident in VMEM; one row-tile per grid step."""
    f32, bf16 = jnp.float32, jnp.bfloat16
    Hp = out_ref.shape[-1]

    orig = orig_ref[...].astype(f32)
    x1 = x1_ref[...].astype(f32)
    x2 = x2_ref[...].astype(f32)

    orig_b = orig.astype(bf16)
    x1_b = x1.astype(bf16)
    x2_b = x2.astype(bf16)
    p1_b = (orig * x1).astype(bf16)
    p2_b = (orig * x2).astype(bf16)

    # One merged dot for the shared `orig` operand: (tm, 2*Hp), split at lane boundary Hp.
    ho = jnp.dot(orig_b, w12o_ref[...], preferred_element_type=f32)

    h1 = jnp.maximum(
        ho[:, :Hp]
        + jnp.dot(x1_b, w1x_ref[...], preferred_element_type=f32)
        + jnp.dot(p1_b, w1p_ref[...], preferred_element_type=f32)
        + b1_ref[...], 0.0)
    h2 = jnp.maximum(
        ho[:, Hp:]
        + jnp.dot(x2_b, w2x_ref[...], preferred_element_type=f32)
        + jnp.dot(p2_b, w2p_ref[...], preferred_element_type=f32)
        + b2_ref[...], 0.0)

    logits = (jnp.dot(h1.astype(bf16), w3a_ref[...], preferred_element_type=f32)
              + jnp.dot(h2.astype(bf16), w3b_ref[...], preferred_element_type=f32)
              + b3_ref[...])
    prob = jax.nn.sigmoid(logits)

    # prob*x1 + (1-prob)*x2 == x2 + prob*(x1 - x2)
    out_ref[...] = (x2 + prob * (x1 - x2)).astype(out_ref.dtype)


def fuse_layer_kernel_ktiled(orig_ref, x1_ref, x2_ref,
                             w12o_ref, w1x_ref, w1p_ref, w2x_ref, w2p_ref,
                             w3a_ref, w3b_ref, b1_ref, b2_ref, b3_ref,
                             out_ref, acc1_ref, acc2_ref):
    """Large-H variant: first-layer weights streamed in K-chunks, f32 accumulators in
    scratch, W3 + sigmoid + blend run on the last K step."""
    f32, bf16 = jnp.float32, jnp.bfloat16
    Hp = out_ref.shape[-1]
    tk = w1x_ref.shape[0]
    k = pl.program_id(1)
    nk = pl.num_programs(1)

    @pl.when(k == 0)
    def _():
        acc1_ref[...] = jnp.broadcast_to(b1_ref[...].astype(f32), acc1_ref.shape)
        acc2_ref[...] = jnp.broadcast_to(b2_ref[...].astype(f32), acc2_ref.shape)

    col = pl.ds(pl.multiple_of(k * tk, 128), tk)
    orig_c = orig_ref[:, col].astype(f32)
    x1_c = x1_ref[:, col].astype(f32)
    x2_c = x2_ref[:, col].astype(f32)

    ho = jnp.dot(orig_c.astype(bf16), w12o_ref[...], preferred_element_type=f32)

    acc1_ref[...] += (
        ho[:, :Hp]
        + jnp.dot(x1_c.astype(bf16), w1x_ref[...], preferred_element_type=f32)
        + jnp.dot((orig_c * x1_c).astype(bf16), w1p_ref[...], preferred_element_type=f32))
    acc2_ref[...] += (
        ho[:, Hp:]
        + jnp.dot(x2_c.astype(bf16), w2x_ref[...], preferred_element_type=f32)
        + jnp.dot((orig_c * x2_c).astype(bf16), w2p_ref[...], preferred_element_type=f32))

    @pl.when(k == nk - 1)
    def _():
        h1 = jnp.maximum(acc1_ref[...], 0.0)
        h2 = jnp.maximum(acc2_ref[...], 0.0)
        logits = (jnp.dot(h1.astype(bf16), w3a_ref[...], preferred_element_type=f32)
                  + jnp.dot(h2.astype(bf16), w3b_ref[...], preferred_element_type=f32)
                  + b3_ref[...])
        prob = jax.nn.sigmoid(logits)
        x1 = x1_ref[...].astype(f32)
        x2 = x2_ref[...].astype(f32)
        out_ref[...] = (x2 + prob * (x1 - x2)).astype(out_ref.dtype)


# ----------------------------------------------------------------------------- params
def prepare_params(params):
    """One-time host-side transform: fold the concat structure into the weights,
    merge the two `orig` slabs, split W3, pad hidden to a lane-dense width, cast bf16."""
    H = params["b1"].shape[-1]
    Hp = _round_up(H, 128)

    def fold(w):                         # w: [4H, H] (already transposed for x @ W)
        wo = w[0:H] + w[2 * H:3 * H]     # multiplies `orig`
        wx = w[H:2 * H] - w[2 * H:3 * H]  # multiplies `x`
        wp = w[3 * H:4 * H]              # multiplies `orig * x`
        return wo, wx, wp

    w1o, w1x, w1p = fold(params["w1"])
    w2o, w2x, w2p = fold(params["w2"])
    w3a, w3b = params["w3"][0:H], params["w3"][H:2 * H]

    def pad_w(w):
        return jnp.pad(w, ((0, Hp - H), (0, Hp - H))).astype(jnp.bfloat16)

    def pad_b(b):
        return jnp.pad(b, ((0, 0), (0, Hp - H))).astype(jnp.float32)

    # Merge the two dots that share `orig`: pad each half FIRST (so the kernel's split at
    # column Hp is exact), then concat along the output dim -> one [Hp, 2Hp] bf16 slab.
    w12o = jnp.concatenate([pad_w(w1o), pad_w(w2o)], axis=1)

    return {
        "H": H, "Hp": Hp,
        "w12o": w12o,
        "w1x": pad_w(w1x), "w1p": pad_w(w1p),
        "w2x": pad_w(w2x), "w2p": pad_w(w2p),
        "w3a": pad_w(w3a), "w3b": pad_w(w3b),
        "b1": pad_b(params["b1"]), "b2": pad_b(params["b2"]), "b3": pad_b(params["b3"]),
    }


# ----------------------------------------------------------------------------- wrapper
def fuse_layer(orig, input1, input2, fp, *, activations_bf16=None,
               force_k_tiling=False, max_tk=None):
    """orig/input1/input2: [..., H] float32. fp: output of prepare_params()."""
    H, Hp = fp["H"], fp["Hp"]
    lead = orig.shape[:-1]
    M = 1
    for d in lead:
        M *= d
    out_dtype = orig.dtype

    if activations_bf16 is None:
        # Memory-bound regime (arithmetic intensity ~ Hp flops/byte): halve activation
        # HBM traffic with bf16 streams; the sigmoid and blend stay f32 in-kernel.
        activations_bf16 = Hp <= 256
    act_dtype = jnp.bfloat16 if activations_bf16 else jnp.float32
    act_bytes = 2 if activations_bf16 else 4
    granule = 16 if activations_bf16 else 8

    def prep(a):
        a = a.reshape(M, H)
        if Hp != H:
            a = jnp.pad(a, ((0, 0), (0, Hp - H)))
        return a.astype(act_dtype)

    # NOTE: keep fuse_layer inside the caller's jit so these pads/casts/reshapes and the
    # final [:, :H] slice fuse with neighbouring ops instead of extra HBM passes.
    orig2d, x1_2d, x2_2d = prep(orig), prep(input1), prep(input2)

    vmem_cap, n_cores = _tpu_hw()
    # VMEM budget: physical capacity minus headroom for Mosaic scratch / DMA machinery,
    # capped at ~100 MiB on 128-MiB parts (v5e/v6e); ~48 MiB on v7x.
    budget = max(min(vmem_cap - 16 * _MIB, 100 * _MIB), 24 * _MIB)

    single_buf = _single_buffer_supported()
    wf = 1 if single_buf else 2          # weight VMEM factor if constants get double-buffered

    def cspec(shape, imap):              # constant (weight / bias) block
        if single_buf:
            return pl.BlockSpec(shape, imap, pipeline_mode=pl.Buffered(1))
        return pl.BlockSpec(shape, imap)

    cost = pl.CostEstimate(
        flops=int(16 * M * Hp * Hp),
        transcendentals=int(M * Hp),
        bytes_accessed=int(M * Hp * (3 * act_bytes + 4) + 16 * Hp * Hp + 12 * Hp),
    )

    weights = (fp["w12o"], fp["w1x"], fp["w1p"], fp["w2x"], fp["w2p"],
               fp["w3a"], fp["w3b"], fp["b1"], fp["b2"], fp["b3"])

    tm = None if force_k_tiling else _choose_tm(M, Hp, act_bytes, wf, budget, n_cores, granule)

    if tm is not None:
        # ---- resident-weights kernel -------------------------------------------------
        c1 = lambda i: (0, 0)
        act_spec = pl.BlockSpec((tm, Hp), lambda i: (i, 0))
        in_specs = ([act_spec, act_spec, act_spec]
                    + [cspec((Hp, 2 * Hp), c1)]
                    + [cspec((Hp, Hp), c1) for _ in range(6)]
                    + [cspec((1, Hp), c1) for _ in range(3)])
        footprint = 16 * Hp * Hp * wf + tm * Hp * (2 * (3 * act_bytes + 4) + 56)
        vmem_limit = int(min(budget, max(footprint + 8 * _MIB, 32 * _MIB)))

        out2d = pl.pallas_call(
            fuse_layer_kernel,
            out_shape=jax.ShapeDtypeStruct((M, Hp), out_dtype),
            grid_spec=pltpu.PrefetchScalarGridSpec(
                num_scalar_prefetch=0,
                grid=(_cdiv(M, tm),),
                in_specs=in_specs,
                out_specs=pl.BlockSpec((tm, Hp), lambda i: (i, 0)),
            ),
            compiler_params=pltpu.CompilerParams(
                dimension_semantics=("parallel",),
                vmem_limit_bytes=vmem_limit,
            ),
            cost_estimate=cost,
        )(orig2d, x1_2d, x2_2d, *weights)
    else:
        # ---- K-tiled kernel (large H / forced) ----------------------------------------
        picked = _choose_ktile(M, Hp, act_bytes, wf, budget, n_cores, granule, max_tk=max_tk)
        if picked is None:
            raise ValueError(
                f"FuseLayer: hidden={H} (padded {Hp}) too large for the available VMEM "
                f"budget ({budget} B); W3/N tiling not implemented.")
        tm, tk = picked
        c2 = lambda i, k: (0, 0)
        act_spec = pl.BlockSpec((tm, Hp), lambda i, k: (i, 0))
        in_specs = ([act_spec, act_spec, act_spec]
                    + [pl.BlockSpec((tk, 2 * Hp), lambda i, k: (k, 0))]
                    + [pl.BlockSpec((tk, Hp), lambda i, k: (k, 0)) for _ in range(4)]
                    + [cspec((Hp, Hp), c2) for _ in range(2)]
                    + [cspec((1, Hp), c2) for _ in range(3)])
        footprint = (24 * tk * Hp + 4 * Hp * Hp * wf
                     + tm * Hp * (2 * (3 * act_bytes + 4) + 8 + 56))
        vmem_limit = int(min(budget, max(footprint + 8 * _MIB, 32 * _MIB)))

        out2d = pl.pallas_call(
            fuse_layer_kernel_ktiled,
            out_shape=jax.ShapeDtypeStruct((M, Hp), out_dtype),
            grid_spec=pltpu.PrefetchScalarGridSpec(
                num_scalar_prefetch=0,
                grid=(_cdiv(M, tm), Hp // tk),
                in_specs=in_specs,
                out_specs=pl.BlockSpec((tm, Hp), lambda i, k: (i, 0)),
                scratch_shapes=[pltpu.VMEM((tm, Hp), jnp.float32),
                                pltpu.VMEM((tm, Hp), jnp.float32)],
            ),
            compiler_params=pltpu.CompilerParams(
                dimension_semantics=("parallel", "arbitrary"),
                vmem_limit_bytes=vmem_limit,
            ),
            cost_estimate=cost,
        )(orig2d, x1_2d, x2_2d, *weights)

    if Hp != H:
        out2d = out2d[:, :H]
    return out2d.reshape(*lead, H)


# ----------------------------------------------------------------------------- reference
def init_params(key, hidden):
    """Deterministic init matching nn.Linear shapes (stored pre-transposed: [in, out])."""
    k1, k2, k3, k4, k5, k6 = jax.random.split(key, 6)
    scale1 = 1.0 / jnp.sqrt(4 * hidden)
    scale3 = 1.0 / jnp.sqrt(2 * hidden)
    return {
        "w1": jax.random.uniform(k1, (4 * hidden, hidden), jnp.float32, -scale1, scale1),
        "b1": jax.random.uniform(k2, (1, hidden), jnp.float32, -scale1, scale1),
        "w2": jax.random.uniform(k3, (4 * hidden, hidden), jnp.float32, -scale1, scale1),
        "b2": jax.random.uniform(k4, (1, hidden), jnp.float32, -scale1, scale1),
        "w3": jax.random.uniform(k5, (2 * hidden, hidden), jnp.float32, -scale3, scale3),
        "b3": jax.random.uniform(k6, (1, hidden), jnp.float32, -scale3, scale3),
    }


def fuse_layer_ref(orig, input1, input2, params):
    """Pure-JAX f32 reference of the PyTorch forward."""
    cat1 = jnp.concatenate([orig, input1, orig - input1, orig * input1], axis=-1)
    out1 = jax.nn.relu(cat1 @ params["w1"] + params["b1"][0])
    cat2 = jnp.concatenate([orig, input2, orig - input2, orig * input2], axis=-1)
    out2 = jax.nn.relu(cat2 @ params["w2"] + params["b2"][0])
    prob = jax.nn.sigmoid(jnp.concatenate([out1, out2], axis=-1) @ params["w3"] + params["b3"][0])
    return prob * input1 + (1.0 - prob) * input2


if __name__ == "__main__":
    # ---- test 1: default path (small H -> bf16-activation fast path, resident weights)
    batch, seq, hidden = 2, 8, 32
    key = jax.random.PRNGKey(0)
    kp, ko, k1, k2 = jax.random.split(key, 4)

    params = init_params(kp, hidden)
    fused_params = prepare_params(params)   # fold / merge / split / pad / bf16 — once

    orig = jax.random.normal(ko, (batch, seq, hidden), jnp.float32)
    input1 = jax.random.normal(k1, (batch, seq, hidden), jnp.float32)
    input2 = jax.random.normal(k2, (batch, seq, hidden), jnp.float32)

    out = fuse_layer(orig, input1, input2, fused_params)
    out = jax.block_until_ready(out)

    ref = fuse_layer_ref(orig, input1, input2, params)
    assert out.shape == (batch, seq, hidden)
    # bf16 weights + bf16 activation streams vs. the f32 reference: relaxed tolerance.
    assert jnp.allclose(out, ref, atol=3e-2, rtol=3e-2), float(jnp.max(jnp.abs(out - ref)))

    # ---- test 2: exercise the K-tiled (large-H / v7x) path at a small size
    #      (Hp=256, tk capped at 128 -> 2 K accumulation steps).
    hidden2, rows2 = 256, 96
    kp2, ko2, k12, k22 = jax.random.split(jax.random.PRNGKey(1), 4)
    params2 = init_params(kp2, hidden2)
    fused_params2 = prepare_params(params2)
    orig2 = jax.random.normal(ko2, (rows2, hidden2), jnp.float32)
    in1_2 = jax.random.normal(k12, (rows2, hidden2), jnp.float32)
    in2_2 = jax.random.normal(k22, (rows2, hidden2), jnp.float32)

    out2 = fuse_layer(orig2, in1_2, in2_2, fused_params2,
                      activations_bf16=False, force_k_tiling=True, max_tk=128)
    out2 = jax.block_until_ready(out2)
    ref2 = fuse_layer_ref(orig2, in1_2, in2_2, params2)
    assert out2.shape == (rows2, hidden2)
    assert jnp.allclose(out2, ref2, atol=2e-2, rtol=2e-2), float(jnp.max(jnp.abs(out2 - ref2)))

    print("KERNEL_OK")
</pallas_src>

<mosaic_0001>
module attributes {stable_mosaic.version = 11 : i64} {
  func.func @_k(%arg0: i32, %arg1: memref<8x128xf32, #tpu.memory_space<vmem>>, %arg2: memref<8x128xf32, #tpu.memory_space<vmem>>) attributes {dimension_semantics = [#tpu.dimension_semantics<arbitrary>], iteration_bounds = array<i64: 1>, scalar_prefetch = 0 : i64, scratch_operands = 0 : i64, tpu.core_type = #tpu.core_type<tc>, window_params = [{pipeline_mode = #tpu.pipeline_mode<synchronous>, transform_indices = @transform_0, window_bounds = array<i64: 8, 128>}, {pipeline_mode = #tpu.pipeline_mode<synchronous>, transform_indices = @transform_1, window_bounds = array<i64: 8, 128>}]} {
    %c0 = arith.constant 0 : index
    %c0_0 = arith.constant 0 : index
    %0 = vector.load %arg1[%c0, %c0_0] : memref<8x128xf32, #tpu.memory_space<vmem>>, vector<8x128xf32>
    %c0_1 = arith.constant 0 : index
    %c0_2 = arith.constant 0 : index
    %1 = vector.load %arg2[%c0_1, %c0_2] : memref<8x128xf32, #tpu.memory_space<vmem>>, vector<8x128xf32>
    tpu.vector_store %arg2[%c0_1, %c0_2], %0 {strides = array<i32>} : memref<8x128xf32, #tpu.memory_space<vmem>>, vector<8x128xf32>,
    return
  }
  func.func @transform_0(%arg0: i32) -> (i32, i32) {
    %c0_i32 = arith.constant 0 : i32
    %c0_i32_0 = arith.constant 0 : i32
    %c0_i32_1 = arith.constant 0 : i32
    return %c0_i32, %c0_i32_0 : i32, i32
  }
  func.func @transform_1(%arg0: i32) -> (i32, i32) {
    %c0_i32 = arith.constant 0 : i32
    %c0_i32_0 = arith.constant 0 : i32
    %c0_i32_1 = arith.constant 0 : i32
    return %c0_i32, %c0_i32_0 : i32, i32
  }
}

module attributes {stable_mosaic.version = 11 : i64} {
  func.func @fuse_layer_kernel(%arg0: i32, %arg1: memref<16x128xbf16, #tpu.memory_space<vmem>>, %arg2: memref<16x128xbf16, #tpu.memory_space<vmem>>, %arg3: memref<16x128xbf16, #tpu.memory_space<vmem>>, %arg4: memref<128x256xbf16, #tpu.memory_space<vmem>>, %arg5: memref<128x128xbf16, #tpu.memory_space<vmem>>, %arg6: memref<128x128xbf16, #tpu.memory_space<vmem>>, %arg7: memref<128x128xbf16, #tpu.memory_space<vmem>>, %arg8: memref<128x128xbf16, #tpu.memory_space<vmem>>, %arg9: memref<128x128xbf16, #tpu.memory_space<vmem>>, %arg10: memref<128x128xbf16, #tpu.memory_space<vmem>>, %arg11: memref<1x128xf32, #tpu.memory_space<vmem>>, %arg12: memref<1x128xf32, #tpu.memory_space<vmem>>, %arg13: memref<1x128xf32, #tpu.memory_space<vmem>>, %arg14: memref<16x128xf32, #tpu.memory_space<vmem>>) attributes {dimension_semantics = [#tpu.dimension_semantics<parallel>], iteration_bounds = array<i64: 1>, scalar_prefetch = 0 : i64, scratch_operands = 0 : i64, tpu.core_type = #tpu.core_type<tc>, window_params = [{transform_indices = @transform_0, window_bounds = array<i64: 16, 128>}, {transform_indices = @transform_1, window_bounds = array<i64: 16, 128>}, {transform_indices = @transform_2, window_bounds = array<i64: 16, 128>}, {pipeline_mode = #tpu.pipeline_mode<synchronous>, transform_indices = @transform_3, window_bounds = array<i64: 128, 256>}, {pipeline_mode = #tpu.pipeline_mode<synchronous>, transform_indices = @transform_4, window_bounds = array<i64: 128, 128>}, {pipeline_mode = #tpu.pipeline_mode<synchronous>, transform_indices = @transform_5, window_bounds = array<i64: 128, 128>}, {pipeline_mode = #tpu.pipeline_mode<synchronous>, transform_indices = @transform_6, window_bounds = array<i64: 128, 128>}, {pipeline_mode = #tpu.pipeline_mode<synchronous>, transform_indices = @transform_7, window_bounds = array<i64: 128, 128>}, {pipeline_mode = #tpu.pipeline_mode<synchronous>, transform_indices = @transform_8, window_bounds = array<i64: 128, 128>}, {pipeline_mode = #tpu.pipeline_mode<synchronous>, transform_indices = @transform_9, window_bounds = array<i64: 128, 128>}, {pipeline_mode = #tpu.pipeline_mode<synchronous>, transform_indices = @transform_10, window_bounds = array<i64: 1, 128>}, {pipeline_mode = #tpu.pipeline_mode<synchronous>, transform_indices = @transform_11, window_bounds = array<i64: 1, 128>}, {pipeline_mode = #tpu.pipeline_mode<synchronous>, transform_indices = @transform_12, window_bounds = array<i64: 1, 128>}, {transform_indices = @transform_13, window_bounds = array<i64: 16, 128>}]} {
    %c0 = arith.constant 0 : index
    %c0_0 = arith.constant 0 : index
    %0 = vector.load %arg1[%c0, %c0_0] : memref<16x128xbf16, #tpu.memory_space<vmem>>, vector<16x128xbf16>
    %1 = arith.extf %0 : vector<16x128xbf16> to vector<16x128xf32>
    %c0_1 = arith.constant 0 : index
    %c0_2 = arith.constant 0 : index
    %2 = vector.load %arg2[%c0_1, %c0_2] : memref<16x128xbf16, #tpu.memory_space<vmem>>, vector<16x128xbf16>
    %3 = arith.extf %2 : vector<16x128xbf16> to vector<16x128xf32>
    %c0_3 = arith.constant 0 : index
    %c0_4 = arith.constant 0 : index
    %4 = vector.load %arg3[%c0_3, %c0_4] : memref<16x128xbf16, #tpu.memory_space<vmem>>, vector<16x128xbf16>
    %5 = arith.extf %4 : vector<16x128xbf16> to vector<16x128xf32>
    %6 = arith.truncf %1 : vector<16x128xf32> to vector<16x128xbf16>
    %7 = arith.truncf %3 : vector<16x128xf32> to vector<16x128xbf16>
    %8 = arith.truncf %5 : vector<16x128xf32> to vector<16x128xbf16>
    %9 = arith.mulf %1, %3 : vector<16x128xf32>
    %10 = arith.truncf %9 : vector<16x128xf32> to vector<16x128xbf16>
    %11 = arith.mulf %1, %5 : vector<16x128xf32>
    %12 = arith.truncf %11 : vector<16x128xf32> to vector<16x128xbf16>
    %c0_5 = arith.constant 0 : index
    %c0_6 = arith.constant 0 : index
    %13 = vector.load %arg4[%c0_5, %c0_6] : memref<128x256xbf16, #tpu.memory_space<vmem>>, vector<128x256xbf16>
    %cst = arith.constant dense<0.000000e+00> : vector<16x256xf32>
    %14 = tpu.matmul %6, %13, %cst {dimension_numbers = #tpu.dot_dimension_numbers<[1], [0], [0], [1], [0, 0, 1, 1], [], []>} : vector<16x128xbf16>, vector<128x256xbf16>, vector<16x256xf32> -> vector<16x256xf32>
    %15 = vector.extract_strided_slice %14 {offsets = [0, 0], sizes = [16, 128], strides = [1, 1]} : vector<16x256xf32> to vector<16x128xf32>
    %c0_7 = arith.constant 0 : index
    %c0_8 = arith.constant 0 : index
    %16 = vector.load %arg5[%c0_7, %c0_8] : memref<128x128xbf16, #tpu.memory_space<vmem>>, vector<128x128xbf16>
    %cst_9 = arith.constant dense<0.000000e+00> : vector<16x128xf32>
    %17 = tpu.matmul %7, %16, %cst_9 {dimension_numbers = #tpu.dot_dimension_numbers<[1], [0], [0], [1], [0, 0, 1, 1], [], []>} : vector<16x128xbf16>, vector<128x128xbf16>, vector<16x128xf32> -> vector<16x128xf32>
    %18 = arith.addf %15, %17 : vector<16x128xf32>
    %c0_10 = arith.constant 0 : index
    %c0_11 = arith.constant 0 : index
    %19 = vector.load %arg6[%c0_10, %c0_11] : memref<128x128xbf16, #tpu.memory_space<vmem>>, vector<128x128xbf16>
    %cst_12 = arith.constant dense<0.000000e+00> : vector<16x128xf32>
    %20 = tpu.matmul %10, %19, %cst_12 {dimension_numbers = #tpu.dot_dimension_numbers<[1], [0], [0], [1], [0, 0, 1, 1], [], []>} : vector<16x128xbf16>, vector<128x128xbf16>, vector<16x128xf32> -> vector<16x128xf32>
    %21 = arith.addf %18, %20 : vector<16x128xf32>
    %c0_13 = arith.constant 0 : index
    %c0_14 = arith.constant 0 : index
    %22 = vector.load %arg11[%c0_13, %c0_14] : memref<1x128xf32, #tpu.memory_space<vmem>>, vector<1x128xf32>
    %23 = vector.broadcast %22 : vector<1x128xf32> to vector<16x128xf32>
    %24 = arith.addf %21, %23 : vector<16x128xf32>
    %cst_15 = arith.constant 0.000000e+00 : f32
    %25 = vector.broadcast %cst_15 : f32 to vector<16x128xf32>
    %26 = arith.maximumf %24, %25 : vector<16x128xf32>
    %27 = vector.extract_strided_slice %14 {offsets = [0, 128], sizes = [16, 128], strides = [1, 1]} : vector<16x256xf32> to vector<16x128xf32>
    %c0_16 = arith.constant 0 : index
    %c0_17 = arith.constant 0 : index
    %28 = vector.load %arg7[%c0_16, %c0_17] : memref<128x128xbf16, #tpu.memory_space<vmem>>, vector<128x128xbf16>
    %cst_18 = arith.constant dense<0.000000e+00> : vector<16x128xf32>
    %29 = tpu.matmul %8, %28, %cst_18 {dimension_numbers = #tpu.dot_dimension_numbers<[1], [0], [0], [1], [0, 0, 1, 1], [], []>} : vector<16x128xbf16>, vector<128x128xbf16>, vector<16x128xf32> -> vector<16x128xf32>
    %30 = arith.addf %27, %29 : vector<16x128xf32>
    %c0_19 = arith.constant 0 : index
    %c0_20 = arith.constant 0 : index
    %31 = vector.load %arg8[%c0_19, %c0_20] : memref<128x128xbf16, #tpu.memory_space<vmem>>, vector<128x128xbf16>
    %cst_21 = arith.constant dense<0.000000e+00> : vector<16x128xf32>
    %32 = tpu.matmul %12, %31, %cst_21 {dimension_numbers = #tpu.dot_dimension_numbers<[1], [0], [0], [1], [0, 0, 1, 1], [], []>} : vector<16x128xbf16>, vector<128x128xbf16>, vector<16x128xf32> -> vector<16x128xf32>
    %33 = arith.addf %30, %32 : vector<16x128xf32>
    %c0_22 = arith.constant 0 : index
    %c0_23 = arith.constant 0 : index
    %34 = vector.load %arg12[%c0_22, %c0_23] : memref<1x128xf32, #tpu.memory_space<vmem>>, vector<1x128xf32>
    %35 = vector.broadcast %34 : vector<1x128xf32> to vector<16x128xf32>
    %36 = arith.addf %33, %35 : vector<16x128xf32>
    %cst_24 = arith.constant 0.000000e+00 : f32
    %37 = vector.broadcast %cst_24 : f32 to vector<16x128xf32>
    %38 = arith.maximumf %36, %37 : vector<16x128xf32>
    %39 = arith.truncf %26 : vector<16x128xf32> to vector<16x128xbf16>
    %c0_25 = arith.constant 0 : index
    %c0_26 = arith.constant 0 : index
    %40 = vector.load %arg9[%c0_25, %c0_26] : memref<128x128xbf16, #tpu.memory_space<vmem>>, vector<128x128xbf16>
    %cst_27 = arith.constant dense<0.000000e+00> : vector<16x128xf32>
    %41 = tpu.matmul %39, %40, %cst_27 {dimension_numbers = #tpu.dot_dimension_numbers<[1], [0], [0], [1], [0, 0, 1, 1], [], []>} : vector<16x128xbf16>, vector<128x128xbf16>, vector<16x128xf32> -> vector<16x128xf32>
    %42 = arith.truncf %38 : vector<16x128xf32> to vector<16x128xbf16>
    %c0_28 = arith.constant 0 : index
    %c0_29 = arith.constant 0 : index
    %43 = vector.load %arg10[%c0_28, %c0_29] : memref<128x128xbf16, #tpu.memory_space<vmem>>, vector<128x128xbf16>
    %cst_30 = arith.constant dense<0.000000e+00> : vector<16x128xf32>
    %44 = tpu.matmul %42, %43, %cst_30 {dimension_numbers = #tpu.dot_dimension_numbers<[1], [0], [0], [1], [0, 0, 1, 1], [], []>} : vector<16x128xbf16>, vector<128x128xbf16>, vector<16x128xf32> -> vector<16x128xf32>
    %45 = arith.addf %41, %44 : vector<16x128xf32>
    %c0_31 = arith.constant 0 : index
    %c0_32 = arith.constant 0 : index
    %46 = vector.load %arg13[%c0_31, %c0_32] : memref<1x128xf32, #tpu.memory_space<vmem>>, vector<1x128xf32>
    %47 = vector.broadcast %46 : vector<1x128xf32> to vector<16x128xf32>
    %48 = arith.addf %45, %47 : vector<16x128xf32>
    %49 = arith.negf %48 : vector<16x128xf32>
    %50 = math.exp %49 : vector<16x128xf32>
    %cst_33 = arith.constant 1.000000e+00 : f32
    %51 = vector.broadcast %cst_33 : f32 to vector<16x128xf32>
    %52 = arith.addf %51, %50 : vector<16x128xf32>
    %53 = arith.divf %51, %52 : vector<16x128xf32>
    %54 = arith.subf %3, %5 : vector<16x128xf32>
    %55 = arith.mulf %53, %54 : vector<16x128xf32>
    %56 = arith.addf %5, %55 : vector<16x128xf32>
    %c0_34 = arith.constant 0 : index
    %c0_35 = arith.constant 0 : index
    %57 = vector.load %arg14[%c0_34, %c0_35] : memref<16x128xf32, #tpu.memory_space<vmem>>, vector<16x128xf32>
    tpu.vector_store %arg14[%c0_34, %c0_35], %56 {strides = array<i32>} : memref<16x128xf32, #tpu.memory_space<vmem>>, vector<16x128xf32>,
    return
  }
  func.func @transform_0(%arg0: i32) -> (i32, i32) {
    %c0_i32 = arith.constant 0 : i32
    %c0_i32_0 = arith.constant 0 : i32
    return %arg0, %c0_i32 : i32, i32
  }
  func.func @transform_1(%arg0: i32) -> (i32, i32) {
    %c0_i32 = arith.constant 0 : i32
    %c0_i32_0 = arith.constant 0 : i32
    return %arg0, %c0_i32 : i32, i32
  }
  func.func @transform_2(%arg0: i32) -> (i32, i32) {
    %c0_i32 = arith.constant 0 : i32
    %c0_i32_0 = arith.constant 0 : i32
    return %arg0, %c0_i32 : i32, i32
  }
  func.func @transform_3(%arg0: i32) -> (i32, i32) {
    %c0_i32 = arith.constant 0 : i32
    %c0_i32_0 = arith.constant 0 : i32
    %c0_i32_1 = arith.constant 0 : i32
    return %c0_i32, %c0_i32_0 : i32, i32
  }
  func.func @transform_4(%arg0: i32) -> (i32, i32) {
    %c0_i32 = arith.constant 0 : i32
    %c0_i32_0 = arith.constant 0 : i32
    %c0_i32_1 = arith.constant 0 : i32
    return %c0_i32, %c0_i32_0 : i32, i32
  }
  func.func @transform_5(%arg0: i32) -> (i32, i32) {
    %c0_i32 = arith.constant 0 : i32
    %c0_i32_0 = arith.constant 0 : i32
    %c0_i32_1 = arith.constant 0 : i32
    return %c0_i32, %c0_i32_0 : i32, i32
  }
  func.func @transform_6(%arg0: i32) -> (i32, i32) {
    %c0_i32 = arith.constant 0 : i32
    %c0_i32_0 = arith.constant 0 : i32
    %c0_i32_1 = arith.constant 0 : i32
    return %c0_i32, %c0_i32_0 : i32, i32
  }
  func.func @transform_7(%arg0: i32) -> (i32, i32) {
    %c0_i32 = arith.constant 0 : i32
    %c0_i32_0 = arith.constant 0 : i32
    %c0_i32_1 = arith.constant 0 : i32
    return %c0_i32, %c0_i32_0 : i32, i32
  }
  func.func @transform_8(%arg0: i32) -> (i32, i32) {
    %c0_i32 = arith.constant 0 : i32
    %c0_i32_0 = arith.constant 0 : i32
    %c0_i32_1 = arith.constant 0 : i32
    return %c0_i32, %c0_i32_0 : i32, i32
  }
  func.func @transform_9(%arg0: i32) -> (i32, i32) {
    %c0_i32 = arith.constant 0 : i32
    %c0_i32_0 = arith.constant 0 : i32
    %c0_i32_1 = arith.constant 0 : i32
    return %c0_i32, %c0_i32_0 : i32, i32
  }
  func.func @transform_10(%arg0: i32) -> (i32, i32) {
    %c0_i32 = arith.constant 0 : i32
    %c0_i32_0 = arith.constant 0 : i32
    %c0_i32_1 = arith.constant 0 : i32
    return %c0_i32, %c0_i32_0 : i32, i32
  }
  func.func @transform_11(%arg0: i32) -> (i32, i32) {
    %c0_i32 = arith.constant 0 : i32
    %c0_i32_0 = arith.constant 0 : i32
    %c0_i32_1 = arith.constant 0 : i32
    return %c0_i32, %c0_i32_0 : i32, i32
  }
  func.func @transform_12(%arg0: i32) -> (i32, i32) {
    %c0_i32 = arith.constant 0 : i32
    %c0_i32_0 = arith.constant 0 : i32
    %c0_i32_1 = arith.constant 0 : i32
    return %c0_i32, %c0_i32_0 : i32, i32
  }
  func.func @transform_13(%arg0: i32) -> (i32, i32) {
    %c0_i32 = arith.constant 0 : i32
    %c0_i32_0 = arith.constant 0 : i32
    return %arg0, %c0_i32 : i32, i32
  }
}

</mosaic_0001>

<llo_original>
// kernel: tpu_custom_call.1
$region0: #{tpu_custom_call.1}
  #allocation0 [shape = 'u32[]', space=smem, size = 0x4, offset = 0x4, fixed_abs, tag = 'smem constant byte address 0x4 - core index']
  #allocation1 [shape = 'u32[144,128]{1,0:T(1,128)}', space=vmem, size = 0x12000, scoped, tag = 'internal scratch']
  %s0 = inlined_call_operand.hbm [shape: f32[8,128], index: 0, kind: input, shape index: {}]
  %s1 = inlined_call_operand.hbm [shape: f32[8,128], index: 1, kind: output, shape index: {}]
  %s2 = sld [smem:[#allocation0]]
  $region18: #{tpu_custom_call.1} parent=0
    _
  %s4 = ssub.s32 1, %s2
  %s5 = scalar_select 0, %s4, %s2
  $region1: #{tpu_custom_call.1} parent=0
    #allocation2 [shape = 'u8[4096]{0}', space=vmem, size = 0x1000, scoped, tag = 'input window, operand 0, single buffered']
    #allocation3 [shape = 's32[1]{0}', space=sflag, size = 0x4, scoped, tag = 'scoped memory for tpu_custom_call.1']
    #allocation4 [shape = 's32[1]{0}', space=sflag, size = 0x4, scoped, tag = 'scoped memory for tpu_custom_call.1']
    #allocation5 [shape = 'u8[4096]{0}', space=vmem, size = 0x1000, scoped, tag = 'output window, operand 0, single buffered']
    %6 = vsyncpa [#allocation3], 0
    %7 = vsyncpa [#allocation4], 0
    // Predicated region
    $region2: #{tpu_custom_call.1} parent=1 // pred_check
      _
    $region3: #{tpu_custom_call.1} parent=1 // pred_check_branch
      %9 = sbr.rel (0) target = $region5
    $region4: #{tpu_custom_call.1} parent=1 // pred_region
      %s11 = ssub.s32 128, 128
      %12 = vsyncadd [#allocation3], %s11
      %s14 = sshll.u32 [#allocation2], 4
      %s15 = int_to_ptr.vmem [resolvable:$true] %s14
      %17 = dma.hbm_to_vmem [thread:$0]  %s0, 128, %s15, [#allocation3]
    $region5: #{tpu_custom_call.1} parent=1 // pred_fallthru
      _
    // Predicated region
    $region6: #{tpu_custom_call.1} parent=1 // pred_check
      _
    $region7: #{tpu_custom_call.1} parent=1 // pred_check_branch
      %19 = sbr.rel (0) target = $region9
    $region8: #{tpu_custom_call.1} parent=1 // pred_region
      %20 = dma.done [#allocation3], 128
    $region9: #{tpu_custom_call.1} parent=1 // pred_fallthru
      _
    %v21 = vld [vmem:[#allocation2] sm:$0xff]
    %22 = vst [vmem:[#allocation5] sm:$0xff] %v21
    // Predicated region
    $region10: #{tpu_custom_call.1} parent=1 // pred_check
      _
    $region11: #{tpu_custom_call.1} parent=1 // pred_check_branch
      %24 = sbr.rel (0) target = $region13
    $region12: #{tpu_custom_call.1} parent=1 // pred_region
      %s26 = ssub.s32 128, 128
      %27 = vsyncadd [#allocation4], %s26
      %s29 = sshll.u32 [#allocation5], 4
      %s30 = int_to_ptr.vmem [resolvable:$true] %s29
      %32 = dma.vmem_to_hbm [thread:$0]  %s30, 128, %s1, [#allocation4]
    $region13: #{tpu_custom_call.1} parent=1 // pred_fallthru
      _
    // Predicated region
    $region14: #{tpu_custom_call.1} parent=1 // pred_check
      _
    $region15: #{tpu_custom_call.1} parent=1 // pred_check_branch
      %34 = sbr.rel (0) target = $region17
    $region16: #{tpu_custom_call.1} parent=1 // pred_region
      %35 = dma.done [#allocation4], 128
    $region17: #{tpu_custom_call.1} parent=1 // pred_fallthru
      _
    %36 = vsyncpa [#allocation3], 1
    %37 = vsyncpa [#allocation4], 1

// kernel: tpu_custom_call.1
$region0: #{tpu_custom_call.1}
  #allocation0 [shape = 'u32[]', space=smem, size = 0x4, offset = 0x4, fixed_abs, tag = 'smem constant byte address 0x4 - core index']
  #allocation1 [shape = 'u32[144,128]{1,0:T(1,128)}', space=vmem, size = 0x12000, scoped, tag = 'internal scratch']
  %s0 = inlined_call_operand.hbm [shape: bf16[16,128], index: 0, kind: input, shape index: {}]
  %s1 = inlined_call_operand.hbm [shape: bf16[16,128], index: 1, kind: input, shape index: {}]
  %s2 = inlined_call_operand.hbm [shape: bf16[16,128], index: 2, kind: input, shape index: {}]
  %s3 = inlined_call_operand.hbm [shape: bf16[128,256], index: 3, kind: input, shape index: {}]
  %s4 = inlined_call_operand.hbm [shape: bf16[128,128], index: 4, kind: input, shape index: {}]
  %s5 = inlined_call_operand.hbm [shape: bf16[128,128], index: 5, kind: input, shape index: {}]
  %s6 = inlined_call_operand.hbm [shape: bf16[128,128], index: 6, kind: input, shape index: {}]
  %s7 = inlined_call_operand.hbm [shape: bf16[128,128], index: 7, kind: input, shape index: {}]
  %s8 = inlined_call_operand.hbm [shape: bf16[128,128], index: 8, kind: input, shape index: {}]
  %s9 = inlined_call_operand.hbm [shape: bf16[128,128], index: 9, kind: input, shape index: {}]
  %s10 = inlined_call_operand.vmem [shape: f32[1,128], index: 10, kind: input, shape index: {}]
  %s11 = inlined_call_operand.vmem [shape: f32[1,128], index: 11, kind: input, shape index: {}]
  %s12 = inlined_call_operand.vmem [shape: f32[1,128], index: 12, kind: input, shape index: {}]
  %s13 = inlined_call_operand.hbm [shape: f32[16,128], index: 13, kind: output, shape index: {}]
  %s14 = sld [smem:[#allocation0]]
  $region102: #{tpu_custom_call.1} parent=0
    _
  %s16 = ssub.s32 1, %s14
  %s17 = scalar_select 0, %s16, %s14
  $region1: #{tpu_custom_call.1} parent=0
    #allocation2 [shape = 'u8[4096]{0}', space=vmem, size = 0x1000, scoped, tag = 'input window, operand 0, single buffered']
    #allocation3 [shape = 's32[1]{0}', space=sflag, size = 0x4, scoped, tag = 'scoped memory for tpu_custom_call.1']
    #allocation4 [shape = 's32[1]{0}', space=sflag, size = 0x4, scoped, tag = 'scoped memory for tpu_custom_call.1']
    #allocation5 [shape = 'u8[4096]{0}', space=vmem, size = 0x1000, scoped, tag = 'input window, operand 1, single buffered']
    #allocation6 [shape = 's32[1]{0}', space=sflag, size = 0x4, scoped, tag = 'scoped memory for tpu_custom_call.1']
    #allocation7 [shape = 'u8[4096]{0}', space=vmem, size = 0x1000, scoped, tag = 'input window, operand 2, single buffered']
    #allocation8 [shape = 'u8[65536]{0}', space=vmem, size = 0x10000, scoped, tag = 'input window, operand 3, single buffered']
    #allocation9 [shape = 's32[1]{0}', space=sflag, size = 0x4, scoped, tag = 'scoped memory for tpu_custom_call.1']
    #allocation10 [shape = 'u8[32768]{0}', space=vmem, size = 0x8000, scoped, tag = 'input window, operand 4, single buffered']
    #allocation11 [shape = 'u8[32768]{0}', space=vmem, size = 0x8000, scoped, tag = 'input window, operand 5, single buffered']
    #allocation12 [shape = 's32[1]{0}', space=sflag, size = 0x4, scoped, tag = 'scoped memory for tpu_custom_call.1']
    #allocation13 [shape = 'u8[32768]{0}', space=vmem, size = 0x8000, scoped, tag = 'input window, operand 6, single buffered']
    #allocation14 [shape = 'u8[32768]{0}', space=vmem, size = 0x8000, scoped, tag = 'input window, operand 7, single buffered']
    #allocation15 [shape = 's32[1]{0}', space=sflag, size = 0x4, scoped, tag = 'scoped memory for tpu_custom_call.1']
    #allocation16 [shape = 'u8[32768]{0}', space=vmem, size = 0x8000, scoped, tag = 'input window, operand 8, single buffered']
    #allocation17 [shape = 'u8[32768]{0}', space=vmem, size = 0x8000, scoped, tag = 'input window, operand 9, single buffered']
    #allocation18 [shape = 's32[1]{0}', space=sflag, size = 0x4, scoped, tag = 'scoped memory for tpu_custom_call.1']
    #allocation19 [shape = 'u8[8192]{0}', space=vmem, size = 0x2000, scoped, tag = 'output window, operand 0, single buffered']
    %18 = vsyncpa [#allocation3], 0
    %19 = vsyncpa [#allocation6], 0
    %20 = vsyncpa [#allocation9], 0
    %21 = vsyncpa [#allocation12], 0
    %22 = vsyncpa [#allocation15], 0
    %23 = vsyncpa [#allocation18], 0
    %24 = vsyncpa [#allocation4], 0
    // Predicated region
    $region2: #{tpu_custom_call.1} parent=1 // pred_check
      _
    $region3: #{tpu_custom_call.1} parent=1 // pred_check_branch
      %26 = sbr.rel (0) target = $region5
    $region4: #{tpu_custom_call.1} parent=1 // pred_region
      %s28 = ssub.s32 128, 128
      %29 = vsyncadd [#allocation3], %s28
      %s30 = sshll.u32 [#allocation2], 4
      %s31 = int_to_ptr.vmem [resolvable:$true] %s30
      %36 = dma.hbm_to_vmem [thread:$0]  %s0, 128, %s31, [#allocation3], 64, 64, 4
    $region5: #{tpu_custom_call.1} parent=1 // pred_fallthru
      _
    // Predicated region
    $region6: #{tpu_custom_call.1} parent=1 // pred_check
      _
    $region7: #{tpu_custom_call.1} parent=1 // pred_check_branch
      %38 = sbr.rel (0) target = $region9
    $region8: #{tpu_custom_call.1} parent=1 // pred_region
      %s40 = ssub.s32 128, 128
      %41 = vsyncadd [#allocation6], %s40
      %s42 = sshll.u32 [#allocation5], 4
      %s43 = int_to_ptr.vmem [resolvable:$true] %s42
      %48 = dma.hbm_to_vmem [thread:$0]  %s1, 128, %s43, [#allocation6], 64, 64, 4
    $region9: #{tpu_custom_call.1} parent=1 // pred_fallthru
      _
    // Predicated region
    $region10: #{tpu_custom_call.1} parent=1 // pred_check
      _
    $region11: #{tpu_custom_call.1} parent=1 // pred_check_branch
      %50 = sbr.rel (0) target = $region13
    $region12: #{tpu_custom_call.1} parent=1 // pred_region
      %s52 = ssub.s32 128, 128
      %53 = vsyncadd [#allocation6], %s52
      %s54 = sshll.u32 [#allocation7], 4
      %s55 = int_to_ptr.vmem [resolvable:$true] %s54
      %60 = dma.hbm_to_vmem [thread:$0]  %s2, 128, %s55, [#allocation6], 64, 64, 4
    $region13: #{tpu_custom_call.1} parent=1 // pred_fallthru
      _
    // Predicated region
    $region14: #{tpu_custom_call.1} parent=1 // pred_check
      _
    $region15: #{tpu_custom_call.1} parent=1 // pred_check_branch
      %62 = sbr.rel (0) target = $region17
    $region16: #{tpu_custom_call.1} parent=1 // pred_region
      %s64 = ssub.s32 2048, 2048
      %65 = vsyncadd [#allocation9], %s64
      %s66 = sshll.u32 [#allocation8], 4
      %s67 = int_to_ptr.vmem [resolvable:$true] %s66
      %72 = dma.hbm_to_vmem [thread:$0]  %s3, 2048, %s67, [#allocation9], 128, 128, 8
    $region17: #{tpu_custom_call.1} parent=1 // pred_fallthru
      _
    // Predicated region
    $region18: #{tpu_custom_call.1} parent=1 // pred_check
      _
    $region19: #{tpu_custom_call.1} parent=1 // pred_check_branch
      %74 = sbr.rel (0) target = $region21
    $region20: #{tpu_custom_call.1} parent=1 // pred_region
      %s76 = ssub.s32 1024, 1024
      %77 = vsyncadd [#allocation9], %s76
      %s78 = sshll.u32 [#allocation10], 4
      %s79 = int_to_ptr.vmem [resolvable:$true] %s78
      %84 = dma.hbm_to_vmem [thread:$0]  %s4, 1024, %s79, [#allocation9], 64, 64, 4
    $region21: #{tpu_custom_call.1} parent=1 // pred_fallthru
      _
    // Predicated region
    $region22: #{tpu_custom_call.1} parent=1 // pred_check
      _
    $region23: #{tpu_custom_call.1} parent=1 // pred_check_branch
      %86 = sbr.rel (0) target = $region25
    $region24: #{tpu_custom_call.1} parent=1 // pred_region
      %s88 = ssub.s32 1024, 1024
      %89 = vsyncadd [#allocation12], %s88
      %s90 = sshll.u32 [#allocation11], 4
      %s91 = int_to_ptr.vmem [resolvable:$true] %s90
      %96 = dma.hbm_to_vmem [thread:$0]  %s5, 1024, %s91, [#allocation12], 64, 64, 4
    $region25: #{tpu_custom_call.1} parent=1 // pred_fallthru
      _
    // Predicated region
    $region26: #{tpu_custom_call.1} parent=1 // pred_check
      _
    $region27: #{tpu_custom_call.1} parent=1 // pred_check_branch
      %98 = sbr.rel (0) target = $region29
    $region28: #{tpu_custom_call.1} parent=1 // pred_region
      %s100 = ssub.s32 1024, 1024
      %101 = vsyncadd [#allocation12], %s100
      %s102 = sshll.u32 [#allocation13], 4
      %s103 = int_to_ptr.vmem [resolvable:$true] %s102
      %108 = dma.hbm_to_vmem [thread:$0]  %s6, 1024, %s103, [#allocation12], 64, 64, 4
    $region29: #{tpu_custom_call.1} parent=1 // pred_fallthru
      _
    // Predicated region
    $region30: #{tpu_custom_call.1} parent=1 // pred_check
      _
    $region31: #{tpu_custom_call.1} parent=1 // pred_check_branch
      %110 = sbr.rel (0) target = $region33
    $region32: #{tpu_custom_call.1} parent=1 // pred_region
      %s112 = ssub.s32 1024, 1024
      %113 = vsyncadd [#allocation15], %s112
      %s114 = sshll.u32 [#allocation14], 4
      %s115 = int_to_ptr.vmem [resolvable:$true] %s114
      %120 = dma.hbm_to_vmem [thread:$0]  %s7, 1024, %s115, [#allocation15], 64, 64, 4
    $region33: #{tpu_custom_call.1} parent=1 // pred_fallthru
      _
    // Predicated region
    $region34: #{tpu_custom_call.1} parent=1 // pred_check
      _
    $region35: #{tpu_custom_call.1} parent=1 // pred_check_branch
      %122 = sbr.rel (0) target = $region37
    $region36: #{tpu_custom_call.1} parent=1 // pred_region
      %s124 = ssub.s32 1024, 1024
      %125 = vsyncadd [#allocation15], %s124
      %s126 = sshll.u32 [#allocation16], 4
      %s127 = int_to_ptr.vmem [resolvable:$true] %s126
      %132 = dma.hbm_to_vmem [thread:$0]  %s8, 1024, %s127, [#allocation15], 64, 64, 4
    $region37: #{tpu_custom_call.1} parent=1 // pred_fallthru
      _
    // Predicated region
    $region38: #{tpu_custom_call.1} parent=1 // pred_check
      _
    $region39: #{tpu_custom_call.1} parent=1 // pred_check_branch
      %134 = sbr.rel (0) target = $region41
    $region40: #{tpu_custom_call.1} parent=1 // pred_region
      %s136 = ssub.s32 1024, 1024
      %137 = vsyncadd [#allocation18], %s136
      %s138 = sshll.u32 [#allocation17], 4
      %s139 = int_to_ptr.vmem [resolvable:$true] %s138
      %144 = dma.hbm_to_vmem [thread:$0]  %s9, 1024, %s139, [#allocation18], 64, 64, 4
    $region41: #{tpu_custom_call.1} parent=1 // pred_fallthru
      _
    // Predicated region
    $region42: #{tpu_custom_call.1} parent=1 // pred_check
      _
    $region43: #{tpu_custom_call.1} parent=1 // pred_check_branch
      %146 = sbr.rel (0) target = $region45
    $region44: #{tpu_custom_call.1} parent=1 // pred_region
      _
    $region45: #{tpu_custom_call.1} parent=1 // pred_fallthru
      _
    // Predicated region
    $region46: #{tpu_custom_call.1} parent=1 // pred_check
      _
    $region47: #{tpu_custom_call.1} parent=1 // pred_check_branch
      %148 = sbr.rel (0) target = $region49
    $region48: #{tpu_custom_call.1} parent=1 // pred_region
      _
    $region49: #{tpu_custom_call.1} parent=1 // pred_fallthru
      _
    // Predicated region
    $region50: #{tpu_custom_call.1} parent=1 // pred_check
      _
    $region51: #{tpu_custom_call.1} parent=1 // pred_check_branch
      %150 = sbr.rel (0) target = $region53
    $region52: #{tpu_custom_call.1} parent=1 // pred_region
      _
    $region53: #{tpu_custom_call.1} parent=1 // pred_fallthru
      _
    // Predicated region
    $region54: #{tpu_custom_call.1} parent=1 // pred_check
      _
    $region55: #{tpu_custom_call.1} parent=1 // pred_check_branch
      %152 = sbr.rel (0) target = $region57
    $region56: #{tpu_custom_call.1} parent=1 // pred_region
      %153 = dma.done [#allocation3], 128
    $region57: #{tpu_custom_call.1} parent=1 // pred_fallthru
      _
    // Predicated region
    $region58: #{tpu_custom_call.1} parent=1 // pred_check
      _
    $region59: #{tpu_custom_call.1} parent=1 // pred_check_branch
      %155 = sbr.rel (0) target = $region61
    $region60: #{tpu_custom_call.1} parent=1 // pred_region
      %156 = dma.done [#allocation6], 128
    $region61: #{tpu_custom_call.1} parent=1 // pred_fallthru
      _
    // Predicated region
    $region62: #{tpu_custom_call.1} parent=1 // pred_check
      _
    $region63: #{tpu_custom_call.1} parent=1 // pred_check_branch
      %158 = sbr.rel (0) target = $region65
    $region64: #{tpu_custom_call.1} parent=1 // pred_region
      %159 = dma.done [#allocation6], 128
    $region65: #{tpu_custom_call.1} parent=1 // pred_fallthru
      _
    // Predicated region
    $region66: #{tpu_custom_call.1} parent=1 // pred_check
      _
    $region67: #{tpu_custom_call.1} parent=1 // pred_check_branch
      %161 = sbr.rel (0) target = $region69
    $region68: #{tpu_custom_call.1} parent=1 // pred_region
      %162 = dma.done [#allocation9], 2048
    $region69: #{tpu_custom_call.1} parent=1 // pred_fallthru
      _
    // Predicated region
    $region70: #{tpu_custom_call.1} parent=1 // pred_check
      _
    $region71: #{tpu_custom_call.1} parent=1 // pred_check_branch
      %164 = sbr.rel (0) target = $region73
    $region72: #{tpu_custom_call.1} parent=1 // pred_region
      %165 = dma.done [#allocation9], 1024
    $region73: #{tpu_custom_call.1} parent=1 // pred_fallthru
      _
    // Predicated region
    $region74: #{tpu_custom_call.1} parent=1 // pred_check
      _
    $region75: #{tpu_custom_call.1} parent=1 // pred_check_branch
      %167 = sbr.rel (0) target = $region77
    $region76: #{tpu_custom_call.1} parent=1 // pred_region
      %168 = dma.done [#allocation12], 1024
    $region77: #{tpu_custom_call.1} parent=1 // pred_fallthru
      _
    // Predicated region
    $region78: #{tpu_custom_call.1} parent=1 // pred_check
      _
    $region79: #{tpu_custom_call.1} parent=1 // pred_check_branch
      %170 = sbr.rel (0) target = $region81
    $region80: #{tpu_custom_call.1} parent=1 // pred_region
      %171 = dma.done [#allocation12], 1024
    $region81: #{tpu_custom_call.1} parent=1 // pred_fallthru
      _
    // Predicated region
    $region82: #{tpu_custom_call.1} parent=1 // pred_check
      _
    $region83: #{tpu_custom_call.1} parent=1 // pred_check_branch
      %173 = sbr.rel (0) target = $region85
    $region84: #{tpu_custom_call.1} parent=1 // pred_region
      %174 = dma.done [#allocation15], 1024
    $region85: #{tpu_custom_call.1} parent=1 // pred_fallthru
      _
    // Predicated region
    $region86: #{tpu_custom_call.1} parent=1 // pred_check
      _
    $region87: #{tpu_custom_call.1} parent=1 // pred_check_branch
      %176 = sbr.rel (0) target = $region89
    $region88: #{tpu_custom_call.1} parent=1 // pred_region
      %177 = dma.done [#allocation15], 1024
    $region89: #{tpu_custom_call.1} parent=1 // pred_fallthru
      _
    // Predicated region
    $region90: #{tpu_custom_call.1} parent=1 // pred_check
      _
    $region91: #{tpu_custom_call.1} parent=1 // pred_check_branch
      %179 = sbr.rel (0) target = $region93
    $region92: #{tpu_custom_call.1} parent=1 // pred_region
      %180 = dma.done [#allocation18], 1024
    $region93: #{tpu_custom_call.1} parent=1 // pred_fallthru
      _
    %v182 = vld [vmem:[#allocation2] sm:$0xf]
    %v183 = vld [vmem:[#allocation2 + $0x4] sm:$0xf]
    %v184 = vunpack.c.l.bf16 %v182
    %v185 = vunpack.c.l.bf16 %v183
    %v186 = vld [vmem:[#allocation5] sm:$0xf]
    %v187 = vld [vmem:[#allocation5 + $0x4] sm:$0xf]
    %v188 = vunpack.c.l.bf16 %v186
    %v189 = vunpack.c.l.bf16 %v187
    %v190 = vld [vmem:[#allocation7] sm:$0xf]
    %v191 = vld [vmem:[#allocation7 + $0x4] sm:$0xf]
    %v192 = vunpack.c.l.bf16 %v190
    %v193 = vunpack.c.l.bf16 %v191
    %v194 = vmul.f32 %v184, %v188
    %v195 = vmul.f32 %v185, %v189
    %v196 = vpack.c.bf16 %v195, %v194
    %v197 = vmul.f32 %v184, %v192
    %v198 = vmul.f32 %v185, %v193
    %v199 = vpack.c.bf16 %v198, %v197
    %v200 = vld [vmem:[#allocation8] sm:$0xff]
    %v201 = vld [vmem:[#allocation8 + $0x8] sm:$0xff]
    %v202 = vld [vmem:[#allocation8 + $0x10] sm:$0xff]
    %v203 = vld [vmem:[#allocation8 + $0x18] sm:$0xff]
    %v204 = vld [vmem:[#allocation8 + $0x20] sm:$0xff]
    %v205 = vld [vmem:[#allocation8 + $0x28] sm:$0xff]
    %v206 = vld [vmem:[#allocation8 + $0x30] sm:$0xff]
    %v207 = vld [vmem:[#allocation8 + $0x38] sm:$0xff]
    %v208 = vld [vmem:[#allocation8 + $0x40] sm:$0xff]
    %v209 = vld [vmem:[#allocation8 + $0x48] sm:$0xff]
    %v210 = vld [vmem:[#allocation8 + $0x50] sm:$0xff]
    %v211 = vld [vmem:[#allocation8 + $0x58] sm:$0xff]
    %v212 = vld [vmem:[#allocation8 + $0x60] sm:$0xff]
    %v213 = vld [vmem:[#allocation8 + $0x68] sm:$0xff]
    %v214 = vld [vmem:[#allocation8 + $0x70] sm:$0xff]
    %v215 = vld [vmem:[#allocation8 + $0x78] sm:$0xff]
    %v218 = vunpack.c.l.b16 %v182
    %v219 = vunpack.c.l.b16 %v183
    %v220 = vpack.c.b16 %v219, %v218
    %v238 = vunpack.c.l.b16 %v200
    %v239 = vunpack.c.h.b16 %v200
    %v240 = vunpack.c.l.b16 %v201
    %v241 = vunpack.c.h.b16 %v201
    %v242 = vunpack.c.l.b16 %v202
    %v243 = vunpack.c.h.b16 %v202
    %v244 = vunpack.c.l.b16 %v203
    %v245 = vunpack.c.h.b16 %v203
    %v246 = vunpack.c.l.b16 %v204
    %v247 = vunpack.c.h.b16 %v204
    %v248 = vunpack.c.l.b16 %v205
    %v249 = vunpack.c.h.b16 %v205
    %v250 = vunpack.c.l.b16 %v206
    %v251 = vunpack.c.h.b16 %v206
    %v252 = vunpack.c.l.b16 %v207
    %v253 = vunpack.c.h.b16 %v207
    %v254 = vunpack.c.l.b16 %v208
    %v255 = vunpack.c.h.b16 %v208
    %v256 = vunpack.c.l.b16 %v209
    %v257 = vunpack.c.h.b16 %v209
    %v258 = vunpack.c.l.b16 %v210
    %v259 = vunpack.c.h.b16 %v210
    %v260 = vunpack.c.l.b16 %v211
    %v261 = vunpack.c.h.b16 %v211
    %v262 = vunpack.c.l.b16 %v212
    %v263 = vunpack.c.h.b16 %v212
    %v264 = vunpack.c.l.b16 %v213
    %v265 = vunpack.c.h.b16 %v213
    %v266 = vunpack.c.l.b16 %v214
    %v267 = vunpack.c.h.b16 %v214
    %v268 = vunpack.c.l.b16 %v215
    %v269 = vunpack.c.h.b16 %v215
    %v270 = vpack.c.b16 %v240, %v238
    %v271 = vpack.c.b16 %v241, %v239
    %v272 = vpack.c.b16 %v244, %v242
    %v273 = vpack.c.b16 %v245, %v243
    %v274 = vpack.c.b16 %v248, %v246
    %v275 = vpack.c.b16 %v249, %v247
    %v276 = vpack.c.b16 %v252, %v250
    %v277 = vpack.c.b16 %v253, %v251
    %v278 = vpack.c.b16 %v256, %v254
    %v279 = vpack.c.b16 %v257, %v255
    %v280 = vpack.c.b16 %v260, %v258
    %v281 = vpack.c.b16 %v261, %v259
    %v282 = vpack.c.b16 %v264, %v262
    %v283 = vpack.c.b16 %v265, %v263
    %v284 = vpack.c.b16 %v268, %v266
    %v285 = vpack.c.b16 %v269, %v267
    %302 = vmatprep.subr.bf16.mxu0 %v271
    %303 = vmatpush1.bf16.msra.mxu0 %v270
    %304 = vmatprep.subr.bf16.mxu0 %v273
    %305 = vmatpush1.bf16.msra.mxu0 %v272
    %306 = vmatprep.subr.bf16.mxu0 %v275
    %307 = vmatpush1.bf16.msra.mxu0 %v274
    %308 = vmatprep.subr.bf16.mxu0 %v277
    %309 = vmatpush1.bf16.msra.mxu0 %v276
    %310 = vmatprep.subr.bf16.mxu0 %v279
    %311 = vmatpush1.bf16.msra.mxu0 %v278
    %312 = vmatprep.subr.bf16.mxu0 %v281
    %313 = vmatpush1.bf16.msra.mxu0 %v280
    %314 = vmatprep.subr.bf16.mxu0 %v283
    %315 = vmatpush1.bf16.msra.mxu0 %v282
    %316 = vmatprep.subr.bf16.mxu0 %v285
    %317 = vmatpush1.bf16.msra.mxu0 %v284
    %318 = vmatprep.subr.bf16.mxu0 0
    %319 = vmatpush1.bf16.msra.mxu0 0
    %320 = vmatprep.subr.bf16.mxu0 0
    %321 = vmatpush1.bf16.msra.mxu0 0
    %322 = vmatprep.subr.bf16.mxu0 0
    %323 = vmatpush1.bf16.msra.mxu0 0
    %324 = vmatprep.subr.bf16.mxu0 0
    %325 = vmatpush1.bf16.msra.mxu0 0
    %326 = vmatprep.subr.bf16.mxu0 0
    %327 = vmatpush1.bf16.msra.mxu0 0
    %328 = vmatprep.subr.bf16.mxu0 0
    %329 = vmatpush1.bf16.msra.mxu0 0
    %330 = vmatprep.subr.bf16.mxu0 0
    %331 = vmatpush1.bf16.msra.mxu0 0
    %332 = vmatprep.subr.bf16.mxu0 0
    %333 = vmatpush1.bf16.msra.mxu0 0
    %334 = vmatprep.mubr.bf16.mxu0 0
    %335 = vmatmul.mubr.bf16.gmra.mrb[0].mxu0 %v220
    %v336 = vpop.f32.mrb[0].mxu0
    %v337 = vadd.f32 0.0, %v336
    %v338 = vpop.f32.mrb[0].mxu0
    %v339 = vadd.f32 0.0, %v338
    %v340 = vpop.f32.mrb[0].mxu0
    %v341 = vadd.f32 0.0, %v340
    %v342 = vpop.f32.mrb[0].mxu0
    %v343 = vadd.f32 0.0, %v342
    %344 = vdwg.mxu0
    %v345 = vld [vmem:[#allocation10] sm:$0xf]
    %v346 = vld [vmem:[#allocation10 + $0x4] sm:$0xf]
    %v347 = vld [vmem:[#allocation10 + $0x8] sm:$0xf]
    %v348 = vld [vmem:[#allocation10 + $0xc] sm:$0xf]
    %v349 = vld [vmem:[#allocation10 + $0x10] sm:$0xf]
    %v350 = vld [vmem:[#allocation10 + $0x14] sm:$0xf]
    %v351 = vld [vmem:[#allocation10 + $0x18] sm:$0xf]
    %v352 = vld [vmem:[#allocation10 + $0x1c] sm:$0xf]
    %v353 = vld [vmem:[#allocation10 + $0x20] sm:$0xf]
    %v354 = vld [vmem:[#allocation10 + $0x24] sm:$0xf]
    %v355 = vld [vmem:[#allocation10 + $0x28] sm:$0xf]
    %v356 = vld [vmem:[#allocation10 + $0x2c] sm:$0xf]
    %v357 = vld [vmem:[#allocation10 + $0x30] sm:$0xf]
    %v358 = vld [vmem:[#allocation10 + $0x34] sm:$0xf]
    %v359 = vld [vmem:[#allocation10 + $0x38] sm:$0xf]
    %v360 = vld [vmem:[#allocation10 + $0x3c] sm:$0xf]
    %v363 = vunpack.c.l.b16 %v186
    %v364 = vunpack.c.l.b16 %v187
    %v365 = vpack.c.b16 %v364, %v363
    %v383 = vunpack.c.l.b16 %v345
    %v384 = vunpack.c.l.b16 %v346
    %v385 = vunpack.c.l.b16 %v347
    %v386 = vunpack.c.l.b16 %v348
    %v387 = vunpack.c.l.b16 %v349
    %v388 = vunpack.c.l.b16 %v350
    %v389 = vunpack.c.l.b16 %v351
    %v390 = vunpack.c.l.b16 %v352
    %v391 = vunpack.c.l.b16 %v353
    %v392 = vunpack.c.l.b16 %v354
    %v393 = vunpack.c.l.b16 %v355
    %v394 = vunpack.c.l.b16 %v356
    %v395 = vunpack.c.l.b16 %v357
    %v396 = vunpack.c.l.b16 %v358
    %v397 = vunpack.c.l.b16 %v359
    %v398 = vunpack.c.l.b16 %v360
    %v399 = vpack.c.b16 %v384, %v383
    %v400 = vpack.c.b16 %v386, %v385
    %v401 = vpack.c.b16 %v388, %v387
    %v402 = vpack.c.b16 %v390, %v389
    %v403 = vpack.c.b16 %v392, %v391
    %v404 = vpack.c.b16 %v394, %v393
    %v405 = vpack.c.b16 %v396, %v395
    %v406 = vpack.c.b16 %v398, %v397
    %415 = vmatprep.subr.bf16.mxu0 0
    %416 = vmatpush1.bf16.msra.mxu0 %v399
    %417 = vmatprep.subr.bf16.mxu0 0
    %418 = vmatpush1.bf16.msra.mxu0 %v400
    %419 = vmatprep.subr.bf16.mxu0 0
    %420 = vmatpush1.bf16.msra.mxu0 %v401
    %421 = vmatprep.subr.bf16.mxu0 0
    %422 = vmatpush1.bf16.msra.mxu0 %v402
    %423 = vmatprep.subr.bf16.mxu0 0
    %424 = vmatpush1.bf16.msra.mxu0 %v403
    %425 = vmatprep.subr.bf16.mxu0 0
    %426 = vmatpush1.bf16.msra.mxu0 %v404
    %427 = vmatprep.subr.bf16.mxu0 0
    %428 = vmatpush1.bf16.msra.mxu0 %v405
    %429 = vmatprep.subr.bf16.mxu0 0
    %430 = vmatpush1.bf16.msra.mxu0 %v406
    %431 = vmatprep.subr.bf16.mxu0 0
    %432 = vmatpush1.bf16.msra.mxu0 0
    %433 = vmatprep.subr.bf16.mxu0 0
    %434 = vmatpush1.bf16.msra.mxu0 0
    %435 = vmatprep.subr.bf16.mxu0 0
    %436 = vmatpush1.bf16.msra.mxu0 0
    %437 = vmatprep.subr.bf16.mxu0 0
    %438 = vmatpush1.bf16.msra.mxu0 0
    %439 = vmatprep.subr.bf16.mxu0 0
    %440 = vmatpush1.bf16.msra.mxu0 0
    %441 = vmatprep.subr.bf16.mxu0 0
    %442 = vmatpush1.bf16.msra.mxu0 0
    %443 = vmatprep.subr.bf16.mxu0 0
    %444 = vmatpush1.bf16.msra.mxu0 0
    %445 = vmatprep.subr.bf16.mxu0 0
    %446 = vmatpush1.bf16.msra.mxu0 0
    %447 = vmatprep.mubr.bf16.mxu0 0
    %448 = vmatmul.mubr.bf16.gmra.mrb[0].mxu0 %v365
    %v449 = vpop.f32.mrb[0].mxu0
    %v450 = vadd.f32 0.0, %v449
    %v451 = vpop.f32.mrb[0].mxu0
    %v452 = vpop.f32.mrb[0].mxu0
    %v453 = vadd.f32 0.0, %v452
    %v454 = vpop.f32.mrb[0].mxu0
    %455 = vdwg.mxu0
    %v456 = vadd.f32 %v337, %v450
    %v457 = vadd.f32 %v341, %v453
    %v458 = vld [vmem:[#allocation11] sm:$0xf]
    %v459 = vld [vmem:[#allocation11 + $0x4] sm:$0xf]
    %v460 = vld [vmem:[#allocation11 + $0x8] sm:$0xf]
    %v461 = vld [vmem:[#allocation11 + $0xc] sm:$0xf]
    %v462 = vld [vmem:[#allocation11 + $0x10] sm:$0xf]
    %v463 = vld [vmem:[#allocation11 + $0x14] sm:$0xf]
    %v464 = vld [vmem:[#allocation11 + $0x18] sm:$0xf]
    %v465 = vld [vmem:[#allocation11 + $0x1c] sm:$0xf]
    %v466 = vld [vmem:[#allocation11 + $0x20] sm:$0xf]
    %v467 = vld [vmem:[#allocation11 + $0x24] sm:$0xf]
    %v468 = vld [vmem:[#allocation11 + $0x28] sm:$0xf]
    %v469 = vld [vmem:[#allocation11 + $0x2c] sm:$0xf]
    %v470 = vld [vmem:[#allocation11 + $0x30] sm:$0xf]
    %v471 = vld [vmem:[#allocation11 + $0x34] sm:$0xf]
    %v472 = vld [vmem:[#allocation11 + $0x38] sm:$0xf]
    %v473 = vld [vmem:[#allocation11 + $0x3c] sm:$0xf]
    %v490 = vunpack.c.l.b16 %v458
    %v491 = vunpack.c.l.b16 %v459
    %v492 = vunpack.c.l.b16 %v460
    %v493 = vunpack.c.l.b16 %v461
    %v494 = vunpack.c.l.b16 %v462
    %v495 = vunpack.c.l.b16 %v463
    %v496 = vunpack.c.l.b16 %v464
    %v497 = vunpack.c.l.b16 %v465
    %v498 = vunpack.c.l.b16 %v466
    %v499 = vunpack.c.l.b16 %v467
    %v500 = vunpack.c.l.b16 %v468
    %v501 = vunpack.c.l.b16 %v469
    %v502 = vunpack.c.l.b16 %v470
    %v503 = vunpack.c.l.b16 %v471
    %v504 = vunpack.c.l.b16 %v472
    %v505 = vunpack.c.l.b16 %v473
    %v506 = vpack.c.b16 %v491, %v490
    %v507 = vpack.c.b16 %v493, %v492
    %v508 = vpack.c.b16 %v495, %v494
    %v509 = vpack.c.b16 %v497, %v496
    %v510 = vpack.c.b16 %v499, %v498
    %v511 = vpack.c.b16 %v501, %v500
    %v512 = vpack.c.b16 %v503, %v502
    %v513 = vpack.c.b16 %v505, %v504
    %522 = vmatprep.subr.bf16.mxu0 0
    %523 = vmatpush1.bf16.msra.mxu0 %v506
    %524 = vmatprep.subr.bf16.mxu0 0
    %525 = vmatpush1.bf16.msra.mxu0 %v507
    %526 = vmatprep.subr.bf16.mxu0 0
    %527 = vmatpush1.bf16.msra.mxu0 %v508
    %528 = vmatprep.subr.bf16.mxu0 0
    %529 = vmatpush1.bf16.msra.mxu0 %v509
    %530 = vmatprep.subr.bf16.mxu0 0
    %531 = vmatpush1.bf16.msra.mxu0 %v510
    %532 = vmatprep.subr.bf16.mxu0 0
    %533 = vmatpush1.bf16.msra.mxu0 %v511
    %534 = vmatprep.subr.bf16.mxu0 0
    %535 = vmatpush1.bf16.msra.mxu0 %v512
    %536 = vmatprep.subr.bf16.mxu0 0
    %537 = vmatpush1.bf16.msra.mxu0 %v513
    %538 = vmatprep.subr.bf16.mxu0 0
    %539 = vmatpush1.bf16.msra.mxu0 0
    %540 = vmatprep.subr.bf16.mxu0 0
    %541 = vmatpush1.bf16.msra.mxu0 0
    %542 = vmatprep.subr.bf16.mxu0 0
    %543 = vmatpush1.bf16.msra.mxu0 0
    %544 = vmatprep.subr.bf16.mxu0 0
    %545 = vmatpush1.bf16.msra.mxu0 0
    %546 = vmatprep.subr.bf16.mxu0 0
    %547 = vmatpush1.bf16.msra.mxu0 0
    %548 = vmatprep.subr.bf16.mxu0 0
    %549 = vmatpush1.bf16.msra.mxu0 0
    %550 = vmatprep.subr.bf16.mxu0 0
    %551 = vmatpush1.bf16.msra.mxu0 0
    %552 = vmatprep.subr.bf16.mxu0 0
    %553 = vmatpush1.bf16.msra.mxu0 0
    %554 = vmatprep.mubr.bf16.mxu0 0
    %555 = vmatmul.mubr.bf16.gmra.mrb[0].mxu0 %v196
    %v556 = vpop.f32.mrb[0].mxu0
    %v557 = vadd.f32 0.0, %v556
    %v558 = vpop.f32.mrb[0].mxu0
    %v559 = vpop.f32.mrb[0].mxu0
    %v560 = vadd.f32 0.0, %v559
    %v561 = vpop.f32.mrb[0].mxu0
    %562 = vdwg.mxu0
    %v563 = vadd.f32 %v456, %v557
    %v564 = vadd.f32 %v457, %v560
    %v565 = vld [vmem:[%s10] sm:$0x1]
    %v567 = vlaneseq
    %v568 = vshrl.u32 %v567, 7
    %v569 = vsub.s32 0, %v568
    %v570 = vrot.slane %v565, %v569
    %v572 = vadd.f32 %v563, %v570
    %v573 = vadd.f32 %v564, %v570
    %v574 = vmax.f32 %v572, 0.0
    %v575 = vmax.f32 %v573, 0.0
    %v576 = vld [vmem:[#allocation13] sm:$0xf]
    %v577 = vld [vmem:[#allocation13 + $0x4] sm:$0xf]
    %v578 = vld [vmem:[#allocation13 + $0x8] sm:$0xf]
    %v579 = vld [vmem:[#allocation13 + $0xc] sm:$0xf]
    %v580 = vld [vmem:[#allocation13 + $0x10] sm:$0xf]
    %v581 = vld [vmem:[#allocation13 + $0x14] sm:$0xf]
    %v582 = vld [vmem:[#allocation13 + $0x18] sm:$0xf]
    %v583 = vld [vmem:[#allocation13 + $0x1c] sm:$0xf]
    %v584 = vld [vmem:[#allocation13 + $0x20] sm:$0xf]
    %v585 = vld [vmem:[#allocation13 + $0x24] sm:$0xf]
    %v586 = vld [vmem:[#allocation13 + $0x28] sm:$0xf]
    %v587 = vld [vmem:[#allocation13 + $0x2c] sm:$0xf]
    %v588 = vld [vmem:[#allocation13 + $0x30] sm:$0xf]
    %v589 = vld [vmem:[#allocation13 + $0x34] sm:$0xf]
    %v590 = vld [vmem:[#allocation13 + $0x38] sm:$0xf]
    %v591 = vld [vmem:[#allocation13 + $0x3c] sm:$0xf]
    %v594 = vunpack.c.l.b16 %v190
    %v595 = vunpack.c.l.b16 %v191
    %v596 = vpack.c.b16 %v595, %v594
    %v614 = vunpack.c.l.b16 %v576
    %v615 = vunpack.c.l.b16 %v577
    %v616 = vunpack.c.l.b16 %v578
    %v617 = vunpack.c.l.b16 %v579
    %v618 = vunpack.c.l.b16 %v580
    %v619 = vunpack.c.l.b16 %v581
    %v620 = vunpack.c.l.b16 %v582
    %v621 = vunpack.c.l.b16 %v583
    %v622 = vunpack.c.l.b16 %v584
    %v623 = vunpack.c.l.b16 %v585
    %v624 = vunpack.c.l.b16 %v586
    %v625 = vunpack.c.l.b16 %v587
    %v626 = vunpack.c.l.b16 %v588
    %v627 = vunpack.c.l.b16 %v589
    %v628 = vunpack.c.l.b16 %v590
    %v629 = vunpack.c.l.b16 %v591
    %v630 = vpack.c.b16 %v615, %v614
    %v631 = vpack.c.b16 %v617, %v616
    %v632 = vpack.c.b16 %v619, %v618
    %v633 = vpack.c.b16 %v621, %v620
    %v634 = vpack.c.b16 %v623, %v622
    %v635 = vpack.c.b16 %v625, %v624
    %v636 = vpack.c.b16 %v627, %v626
    %v637 = vpack.c.b16 %v629, %v628
    %646 = vmatprep.subr.bf16.mxu0 0
    %647 = vmatpush1.bf16.msra.mxu0 %v630
    %648 = vmatprep.subr.bf16.mxu0 0
    %649 = vmatpush1.bf16.msra.mxu0 %v631
    %650 = vmatprep.subr.bf16.mxu0 0
    %651 = vmatpush1.bf16.msra.mxu0 %v632
    %652 = vmatprep.subr.bf16.mxu0 0
    %653 = vmatpush1.bf16.msra.mxu0 %v633
    %654 = vmatprep.subr.bf16.mxu0 0
    %655 = vmatpush1.bf16.msra.mxu0 %v634
    %656 = vmatprep.subr.bf16.mxu0 0
    %657 = vmatpush1.bf16.msra.mxu0 %v635
    %658 = vmatprep.subr.bf16.mxu0 0
    %659 = vmatpush1.bf16.msra.mxu0 %v636
    %660 = vmatprep.subr.bf16.mxu0 0
    %661 = vmatpush1.bf16.msra.mxu0 %v637
    %662 = vmatprep.subr.bf16.mxu0 0
    %663 = vmatpush1.bf16.msra.mxu0 0
    %664 = vmatprep.subr.bf16.mxu0 0
    %665 = vmatpush1.bf16.msra.mxu0 0
    %666 = vmatprep.subr.bf16.mxu0 0
    %667 = vmatpush1.bf16.msra.mxu0 0
    %668 = vmatprep.subr.bf16.mxu0 0
    %669 = vmatpush1.bf16.msra.mxu0 0
    %670 = vmatprep.subr.bf16.mxu0 0
    %671 = vmatpush1.bf16.msra.mxu0 0
    %672 = vmatprep.subr.bf16.mxu0 0
    %673 = vmatpush1.bf16.msra.mxu0 0
    %674 = vmatprep.subr.bf16.mxu0 0
    %675 = vmatpush1.bf16.msra.mxu0 0
    %676 = vmatprep.subr.bf16.mxu0 0
    %677 = vmatpush1.bf16.msra.mxu0 0
    %678 = vmatprep.mubr.bf16.mxu0 0
    %679 = vmatmul.mubr.bf16.gmra.mrb[0].mxu0 %v596
    %v680 = vpop.f32.mrb[0].mxu0
    %v681 = vadd.f32 0.0, %v680
    %v682 = vpop.f32.mrb[0].mxu0
    %v683 = vpop.f32.mrb[0].mxu0
    %v684 = vadd.f32 0.0, %v683
    %v685 = vpop.f32.mrb[0].mxu0
    %686 = vdwg.mxu0
    %v687 = vadd.f32 %v339, %v681
    %v688 = vadd.f32 %v343, %v684
    %v689 = vld [vmem:[#allocation14] sm:$0xf]
    %v690 = vld [vmem:[#allocation14 + $0x4] sm:$0xf]
    %v691 = vld [vmem:[#allocation14 + $0x8] sm:$0xf]
    %v692 = vld [vmem:[#allocation14 + $0xc] sm:$0xf]
    %v693 = vld [vmem:[#allocation14 + $0x10] sm:$0xf]
    %v694 = vld [vmem:[#allocation14 + $0x14] sm:$0xf]
    %v695 = vld [vmem:[#allocation14 + $0x18] sm:$0xf]
    %v696 = vld [vmem:[#allocation14 + $0x1c] sm:$0xf]
    %v697 = vld [vmem:[#allocation14 + $0x20] sm:$0xf]
    %v698 = vld [vmem:[#allocation14 + $0x24] sm:$0xf]
    %v699 = vld [vmem:[#allocation14 + $0x28] sm:$0xf]
    %v700 = vld [vmem:[#allocation14 + $0x2c] sm:$0xf]
    %v701 = vld [vmem:[#allocation14 + $0x30] sm:$0xf]
    %v702 = vld [vmem:[#allocation14 + $0x34] sm:$0xf]
    %v703 = vld [vmem:[#allocation14 + $0x38] sm:$0xf]
    %v704 = vld [vmem:[#allocation14 + $0x3c] sm:$0xf]
    %v721 = vunpack.c.l.b16 %v689
    %v722 = vunpack.c.l.b16 %v690
    %v723 = vunpack.c.l.b16 %v691
    %v724 = vunpack.c.l.b16 %v692
    %v725 = vunpack.c.l.b16 %v693
    %v726 = vunpack.c.l.b16 %v694
    %v727 = vunpack.c.l.b16 %v695
    %v728 = vunpack.c.l.b16 %v696
    %v729 = vunpack.c.l.b16 %v697
    %v730 = vunpack.c.l.b16 %v698
    %v731 = vunpack.c.l.b16 %v699
    %v732 = vunpack.c.l.b16 %v700
    %v733 = vunpack.c.l.b16 %v701
    %v734 = vunpack.c.l.b16 %v702
    %v735 = vunpack.c.l.b16 %v703
    %v736 = vunpack.c.l.b16 %v704
    %v737 = vpack.c.b16 %v722, %v721
    %v738 = vpack.c.b16 %v724, %v723
    %v739 = vpack.c.b16 %v726, %v725
    %v740 = vpack.c.b16 %v728, %v727
    %v741 = vpack.c.b16 %v730, %v729
    %v742 = vpack.c.b16 %v732, %v731
    %v743 = vpack.c.b16 %v734, %v733
    %v744 = vpack.c.b16 %v736, %v735
    %753 = vmatprep.subr.bf16.mxu0 0
    %754 = vmatpush1.bf16.msra.mxu0 %v737
    %755 = vmatprep.subr.bf16.mxu0 0
    %756 = vmatpush1.bf16.msra.mxu0 %v738
    %757 = vmatprep.subr.bf16.mxu0 0
    %758 = vmatpush1.bf16.msra.mxu0 %v739
    %759 = vmatprep.subr.bf16.mxu0 0
    %760 = vmatpush1.bf16.msra.mxu0 %v740
    %761 = vmatprep.subr.bf16.mxu0 0
    %762 = vmatpush1.bf16.msra.mxu0 %v741
    %763 = vmatprep.subr.bf16.mxu0 0
    %764 = vmatpush1.bf16.msra.mxu0 %v742
    %765 = vmatprep.subr.bf16.mxu0 0
    %766 = vmatpush1.bf16.msra.mxu0 %v743
    %767 = vmatprep.subr.bf16.mxu0 0
    %768 = vmatpush1.bf16.msra.mxu0 %v744
    %769 = vmatprep.subr.bf16.mxu0 0
    %770 = vmatpush1.bf16.msra.mxu0 0
    %771 = vmatprep.subr.bf16.mxu0 0
    %772 = vmatpush1.bf16.msra.mxu0 0
    %773 = vmatprep.subr.bf16.mxu0 0
    %774 = vmatpush1.bf16.msra.mxu0 0
    %775 = vmatprep.subr.bf16.mxu0 0
    %776 = vmatpush1.bf16.msra.mxu0 0
    %777 = vmatprep.subr.bf16.mxu0 0
    %778 = vmatpush1.bf16.msra.mxu0 0
    %779 = vmatprep.subr.bf16.mxu0 0
    %780 = vmatpush1.bf16.msra.mxu0 0
    %781 = vmatprep.subr.bf16.mxu0 0
    %782 = vmatpush1.bf16.msra.mxu0 0
    %783 = vmatprep.subr.bf16.mxu0 0
    %784 = vmatpush1.bf16.msra.mxu0 0
    %785 = vmatprep.mubr.bf16.mxu0 0
    %786 = vmatmul.mubr.bf16.gmra.mrb[0].mxu0 %v199
    %v787 = vpop.f32.mrb[0].mxu0
    %v788 = vadd.f32 0.0, %v787
    %v789 = vpop.f32.mrb[0].mxu0
    %v790 = vpop.f32.mrb[0].mxu0
    %v791 = vadd.f32 0.0, %v790
    %v792 = vpop.f32.mrb[0].mxu0
    %793 = vdwg.mxu0
    %v794 = vadd.f32 %v687, %v788
    %v795 = vadd.f32 %v688, %v791
    %v796 = vld [vmem:[%s11] sm:$0x1]
    %v798 = vlaneseq
    %v799 = vshrl.u32 %v798, 7
    %v800 = vsub.s32 0, %v799
    %v801 = vrot.slane %v796, %v800
    %v803 = vadd.f32 %v794, %v801
    %v804 = vadd.f32 %v795, %v801
    %v805 = vmax.f32 %v803, 0.0
    %v806 = vmax.f32 %v804, 0.0
    %v807 = vpack.c.bf16 %v575, %v574
    %v808 = vld [vmem:[#allocation16] sm:$0xf]
    %v809 = vld [vmem:[#allocation16 + $0x4] sm:$0xf]
    %v810 = vld [vmem:[#allocation16 + $0x8] sm:$0xf]
    %v811 = vld [vmem:[#allocation16 + $0xc] sm:$0xf]
    %v812 = vld [vmem:[#allocation16 + $0x10] sm:$0xf]
    %v813 = vld [vmem:[#allocation16 + $0x14] sm:$0xf]
    %v814 = vld [vmem:[#allocation16 + $0x18] sm:$0xf]
    %v815 = vld [vmem:[#allocation16 + $0x1c] sm:$0xf]
    %v816 = vld [vmem:[#allocation16 + $0x20] sm:$0xf]
    %v817 = vld [vmem:[#allocation16 + $0x24] sm:$0xf]
    %v818 = vld [vmem:[#allocation16 + $0x28] sm:$0xf]
    %v819 = vld [vmem:[#allocation16 + $0x2c] sm:$0xf]
    %v820 = vld [vmem:[#allocation16 + $0x30] sm:$0xf]
    %v821 = vld [vmem:[#allocation16 + $0x34] sm:$0xf]
    %v822 = vld [vmem:[#allocation16 + $0x38] sm:$0xf]
    %v823 = vld [vmem:[#allocation16 + $0x3c] sm:$0xf]
    %v824 = vpack.c.bf16 %v806, %v805
    %v825 = vld [vmem:[#allocation17] sm:$0xf]
    %v826 = vld [vmem:[#allocation17 + $0x4] sm:$0xf]
    %v827 = vld [vmem:[#allocation17 + $0x8] sm:$0xf]
    %v828 = vld [vmem:[#allocation17 + $0xc] sm:$0xf]
    %v829 = vld [vmem:[#allocation17 + $0x10] sm:$0xf]
    %v830 = vld [vmem:[#allocation17 + $0x14] sm:$0xf]
    %v831 = vld [vmem:[#allocation17 + $0x18] sm:$0xf]
    %v832 = vld [vmem:[#allocation17 + $0x1c] sm:$0xf]
    %v833 = vld [vmem:[#allocation17 + $0x20] sm:$0xf]
    %v834 = vld [vmem:[#allocation17 + $0x24] sm:$0xf]
    %v835 = vld [vmem:[#allocation17 + $0x28] sm:$0xf]
    %v836 = vld [vmem:[#allocation17 + $0x2c] sm:$0xf]
    %v837 = vld [vmem:[#allocation17 + $0x30] sm:$0xf]
    %v838 = vld [vmem:[#allocation17 + $0x34] sm:$0xf]
    %v839 = vld [vmem:[#allocation17 + $0x38] sm:$0xf]
    %v840 = vld [vmem:[#allocation17 + $0x3c] sm:$0xf]
    %v857 = vunpack.c.l.b16 %v825
    %v858 = vunpack.c.l.b16 %v826
    %v859 = vunpack.c.l.b16 %v827
    %v860 = vunpack.c.l.b16 %v828
    %v861 = vunpack.c.l.b16 %v829
    %v862 = vunpack.c.l.b16 %v830
    %v863 = vunpack.c.l.b16 %v831
    %v864 = vunpack.c.l.b16 %v832
    %v865 = vunpack.c.l.b16 %v833
    %v866 = vunpack.c.l.b16 %v834
    %v867 = vunpack.c.l.b16 %v835
    %v868 = vunpack.c.l.b16 %v836
    %v869 = vunpack.c.l.b16 %v837
    %v870 = vunpack.c.l.b16 %v838
    %v871 = vunpack.c.l.b16 %v839
    %v872 = vunpack.c.l.b16 %v840
    %v873 = vpack.c.b16 %v858, %v857
    %v874 = vpack.c.b16 %v860, %v859
    %v875 = vpack.c.b16 %v862, %v861
    %v876 = vpack.c.b16 %v864, %v863
    %v877 = vpack.c.b16 %v866, %v865
    %v878 = vpack.c.b16 %v868, %v867
    %v879 = vpack.c.b16 %v870, %v869
    %v880 = vpack.c.b16 %v872, %v871
    %889 = vmatprep.subr.bf16.mxu0 0
    %890 = vmatpush1.bf16.msra.mxu0 %v873
    %891 = vmatprep.subr.bf16.mxu0 0
    %892 = vmatpush1.bf16.msra.mxu0 %v874
    %893 = vmatprep.subr.bf16.mxu0 0
    %894 = vmatpush1.bf16.msra.mxu0 %v875
    %895 = vmatprep.subr.bf16.mxu0 0
    %896 = vmatpush1.bf16.msra.mxu0 %v876
    %897 = vmatprep.subr.bf16.mxu0 0
    %898 = vmatpush1.bf16.msra.mxu0 %v877
    %899 = vmatprep.subr.bf16.mxu0 0
    %900 = vmatpush1.bf16.msra.mxu0 %v878
    %901 = vmatprep.subr.bf16.mxu0 0
    %902 = vmatpush1.bf16.msra.mxu0 %v879
    %903 = vmatprep.subr.bf16.mxu0 0
    %904 = vmatpush1.bf16.msra.mxu0 %v880
    %905 = vmatprep.subr.bf16.mxu0 0
    %906 = vmatpush1.bf16.msra.mxu0 0
    %907 = vmatprep.subr.bf16.mxu0 0
    %908 = vmatpush1.bf16.msra.mxu0 0
    %909 = vmatprep.subr.bf16.mxu0 0
    %910 = vmatpush1.bf16.msra.mxu0 0
    %911 = vmatprep.subr.bf16.mxu0 0
    %912 = vmatpush1.bf16.msra.mxu0 0
    %913 = vmatprep.subr.bf16.mxu0 0
    %914 = vmatpush1.bf16.msra.mxu0 0
    %915 = vmatprep.subr.bf16.mxu0 0
    %916 = vmatpush1.bf16.msra.mxu0 0
    %917 = vmatprep.subr.bf16.mxu0 0
    %918 = vmatpush1.bf16.msra.mxu0 0
    %919 = vmatprep.subr.bf16.mxu0 0
    %920 = vmatpush1.bf16.msra.mxu0 0
    %921 = vmatprep.mubr.bf16.mxu0 0
    %922 = vmatmul.mubr.bf16.gmra.mrb[0].mxu0 %v824
    %v923 = vpop.f32.mrb[0].mxu0
    %v924 = vadd.f32 0.0, %v923
    %v925 = vpop.f32.mrb[0].mxu0
    %v926 = vpop.f32.mrb[0].mxu0
    %v927 = vadd.f32 0.0, %v926
    %v928 = vpop.f32.mrb[0].mxu0
    %929 = vdwg.mxu0
    %v946 = vunpack.c.l.b16 %v808
    %v947 = vunpack.c.l.b16 %v809
    %v948 = vunpack.c.l.b16 %v810
    %v949 = vunpack.c.l.b16 %v811
    %v950 = vunpack.c.l.b16 %v812
    %v951 = vunpack.c.l.b16 %v813
    %v952 = vunpack.c.l.b16 %v814
    %v953 = vunpack.c.l.b16 %v815
    %v954 = vunpack.c.l.b16 %v816
    %v955 = vunpack.c.l.b16 %v817
    %v956 = vunpack.c.l.b16 %v818
    %v957 = vunpack.c.l.b16 %v819
    %v958 = vunpack.c.l.b16 %v820
    %v959 = vunpack.c.l.b16 %v821
    %v960 = vunpack.c.l.b16 %v822
    %v961 = vunpack.c.l.b16 %v823
    %v962 = vpack.c.b16 %v947, %v946
    %v963 = vpack.c.b16 %v949, %v948
    %v964 = vpack.c.b16 %v951, %v950
    %v965 = vpack.c.b16 %v953, %v952
    %v966 = vpack.c.b16 %v955, %v954
    %v967 = vpack.c.b16 %v957, %v956
    %v968 = vpack.c.b16 %v959, %v958
    %v969 = vpack.c.b16 %v961, %v960
    %978 = vmatprep.subr.bf16.mxu0 0
    %979 = vmatpush1.bf16.msra.mxu0 %v962
    %980 = vmatprep.subr.bf16.mxu0 0
    %981 = vmatpush1.bf16.msra.mxu0 %v963
    %982 = vmatprep.subr.bf16.mxu0 0
    %983 = vmatpush1.bf16.msra.mxu0 %v964
    %984 = vmatprep.subr.bf16.mxu0 0
    %985 = vmatpush1.bf16.msra.mxu0 %v965
    %986 = vmatprep.subr.bf16.mxu0 0
    %987 = vmatpush1.bf16.msra.mxu0 %v966
    %988 = vmatprep.subr.bf16.mxu0 0
    %989 = vmatpush1.bf16.msra.mxu0 %v967
    %990 = vmatprep.subr.bf16.mxu0 0
    %991 = vmatpush1.bf16.msra.mxu0 %v968
    %992 = vmatprep.subr.bf16.mxu0 0
    %993 = vmatpush1.bf16.msra.mxu0 %v969
    %994 = vmatprep.subr.bf16.mxu0 0
    %995 = vmatpush1.bf16.msra.mxu0 0
    %996 = vmatprep.subr.bf16.mxu0 0
    %997 = vmatpush1.bf16.msra.mxu0 0
    %998 = vmatprep.subr.bf16.mxu0 0
    %999 = vmatpush1.bf16.msra.mxu0 0
    %1000 = vmatprep.subr.bf16.mxu0 0
    %1001 = vmatpush1.bf16.msra.mxu0 0
    %1002 = vmatprep.subr.bf16.mxu0 0
    %1003 = vmatpush1.bf16.msra.mxu0 0
    %1004 = vmatprep.subr.bf16.mxu0 0
    %1005 = vmatpush1.bf16.msra.mxu0 0
    %1006 = vmatprep.subr.bf16.mxu0 0
    %1007 = vmatpush1.bf16.msra.mxu0 0
    %1008 = vmatprep.subr.bf16.mxu0 0
    %1009 = vmatpush1.bf16.msra.mxu0 0
    %1010 = vmatprep.mubr.bf16.mxu0 0
    %1011 = vmatmul.mubr.bf16.gmra.mrb[0].mxu0 %v807
    %v1012 = vpop.f32.mrb[0].mxu0
    %v1013 = vadd.f32 %v924, %v1012
    %v1014 = vpop.f32.mrb[0].mxu0
    %v1015 = vpop.f32.mrb[0].mxu0
    %v1016 = vadd.f32 %v927, %v1015
    %v1017 = vpop.f32.mrb[0].mxu0
    %1018 = vdwg.mxu0
    %v1019 = vld [vmem:[%s12] sm:$0x1]
    %v1021 = vlaneseq
    %v1022 = vshrl.u32 %v1021, 7
    %v1023 = vsub.s32 0, %v1022
    %v1024 = vrot.slane %v1019, %v1023
    %v1026 = vadd.f32 %v1013, %v1024
    %v1027 = vadd.f32 %v1016, %v1024
    %v1028 = vxor.u32 %v1026, 2147483648
    %v1029 = vxor.u32 %v1027, 2147483648
    %v1030 = vmul.f32 %v1028, 1.442695
    %v1031 = vpow.pop %v1030
    %v1032 = vmul.f32 %v1029, 1.442695
    %v1033 = vpow.pop %v1032
    %v1034 = vadd.f32 %v1031, 1.0
    %v1035 = vadd.f32 %v1033, 1.0
    %v1036 = vrcp.pop %v1034
    %v1037 = vmul.f32 1.0, %v1036
    %v1038 = vrcp.pop %v1035
    %v1039 = vmul.f32 1.0, %v1038
    %v1040 = vsub.f32 %v188, %v192
    %v1041 = vsub.f32 %v189, %v193
    %v1042 = vmul.f32 %v1037, %v1040
    %v1043 = vmul.f32 %v1039, %v1041
    %v1044 = vadd.f32 %v192, %v1042
    %v1045 = vadd.f32 %v193, %v1043
    %1046 = vst [vmem:[#allocation19] sm:$0xff] %v1044
    %1047 = vst [vmem:[#allocation19 + $0x8] sm:$0xff] %v1045
    // Predicated region
    $region94: #{tpu_custom_call.1} parent=1 // pred_check
      _
    $region95: #{tpu_custom_call.1} parent=1 // pred_check_branch
      %1049 = sbr.rel (0) target = $region97
    $region96: #{tpu_custom_call.1} parent=1 // pred_region
      %s1051 = ssub.s32 256, 256
      %1052 = vsyncadd [#allocation4], %s1051
      %s1053 = sshll.u32 [#allocation19], 4
      %s1054 = int_to_ptr.vmem [resolvable:$true] %s1053
      %1059 = dma.vmem_to_hbm [thread:$0]  %s1054, 256, %s13, [#allocation4], 128, 128, 8
    $region97: #{tpu_custom_call.1} parent=1 // pred_fallthru
      _
    // Predicated region
    $region98: #{tpu_custom_call.1} parent=1 // pred_check
      _
    $region99: #{tpu_custom_call.1} parent=1 // pred_check_branch
      %1061 = sbr.rel (0) target = $region101
    $region100: #{tpu_custom_call.1} parent=1 // pred_region
      %1062 = dma.done [#allocation4], 256
    $region101: #{tpu_custom_call.1} parent=1 // pred_fallthru
      _
    %1063 = vsyncpa [#allocation3], 1
    %1064 = vsyncpa [#allocation6], 1
    %1065 = vsyncpa [#allocation9], 1
    %1066 = vsyncpa [#allocation12], 1
    %1067 = vsyncpa [#allocation15], 1
    %1068 = vsyncpa [#allocation18], 1
    %1069 = vsyncpa [#allocation4], 1

</llo_original>
